<compile_context>
chip_gen: v7x
topology: tpu7x:2x2x1
jax: 0.10.0
libtpu: 0.0.40
codegen_flags: <defaults>
</compile_context>

<pallas_src>
import functools

import jax
import jax.numpy as jnp
from jax.experimental import pallas as pl
from jax.experimental.pallas import tpu as pltpu


def _tap_offsets(Wp):
    # Flat-grid lane offset of 3x3 tap k (row-major kh, kw) relative to the output pixel.
    return [((k // 3) - 1) * Wp + ((k % 3) - 1) for k in range(9)]


# ----------------------------------------------------------------------------
# Fused kernel: conv1+bn1+relu -> conv2+bn2+relu -> conv3+bias  (one image/step)
# Activations are channel-major [C, Mp]; Mp (flattened padded grid) on lanes.
# ----------------------------------------------------------------------------
def _fused_submodel_kernel(xcol_ref, m_ref, w1_ref, b1_ref, w2_ref, b2_ref, w3_ref,
                           b3_ref, out_ref, col_ref, *, Wp, C1):

    def shift(v, d):
        # result[:, p] = v[:, (p + d) % Mp]; static d, value-level (lane slices + concat).
        return v if d == 0 else jnp.roll(v, -d, axis=1)

    # ---- conv1 (+ folded BN1) + ReLU: single K=9*Cin MXU matmul -------------------------
    y1 = jnp.dot(w1_ref[...], xcol_ref[...], preferred_element_type=jnp.float32)
    y1 = jnp.maximum(y1 + b1_ref[...], 0.0)                       # [C1, Mp] f32

    # ---- rebuild replicate padding of y1 on the flat padded grid (value-level) ----------
    # Columns first (sources are interior columns), then rows (sources are column-fixed
    # rows 1 / Hp-2); no ref read-modify-write, no strided sublane traffic.
    is_left = m_ref[0:1, :] > 0.5
    is_right = m_ref[1:2, :] > 0.5
    is_top = m_ref[2:3, :] > 0.5
    is_bot = m_ref[3:4, :] > 0.5
    y1 = jnp.where(is_left, shift(y1, 1), y1)         # col 0     <- col 1
    y1 = jnp.where(is_right, shift(y1, -1), y1)       # col Wp-1  <- col Wp-2
    y1 = jnp.where(is_top, shift(y1, Wp), y1)         # row 0     <- row 1
    y1 = jnp.where(is_bot, shift(y1, -Wp), y1)        # row Hp-1  <- row Hp-2
    y1 = y1.astype(jnp.bfloat16)                      # MXU input dtype for conv2

    # ---- conv2 im2col in VMEM: 9 lane-shifted copies at sublane offsets k*C1 ------------
    # Roll wrap-around only corrupts halo positions of the wide grid, which are cropped.
    for k, off in enumerate(_tap_offsets(Wp)):
        col_ref[k * C1:(k + 1) * C1, :] = shift(y1, off)

    # ---- conv2 (+ folded BN2) + ReLU: single K=9*C1 MXU matmul ---------------------------
    y2 = jnp.dot(w2_ref[...], col_ref[...], preferred_element_type=jnp.float32)
    y2 = jnp.maximum(y2 + b2_ref[...], 0.0)                       # [C2, Mp] f32

    # ---- conv3 (1x1 + bias) ---------------------------------------------------------------
    y3 = jnp.dot(w3_ref[...], y2.astype(jnp.bfloat16),
                 preferred_element_type=jnp.float32) + b3_ref[...]
    out_ref[...] = y3.astype(out_ref.dtype)           # [C2, Mp]: 324-lane dense store


# ----------------------------------------------------------------------------
# Glue: BN folding
# ----------------------------------------------------------------------------
def fold_bn(gamma, beta, mean, var, eps=1e-5):
    scale = gamma / jnp.sqrt(var + eps)
    shift = beta - mean * scale
    return scale, shift


# ----------------------------------------------------------------------------
# Forward pass of SubModel
# ----------------------------------------------------------------------------
def submodel_forward(x_nchw, params):
    N, Cin, H, W = x_nchw.shape
    C1 = params["conv1_w"].shape[0]               # 32
    C2 = params["conv2_w"].shape[0]               # out_channels
    Hp, Wp = H + 2, W + 2
    Mp = Hp * Wp
    offs = _tap_offsets(Wp)

    # --- channel-major flat padded input + conv1 im2col (tiny; plain JAX) -----------------
    xpad = jnp.pad(x_nchw.astype(jnp.float32),
                   ((0, 0), (0, 0), (1, 1), (1, 1)), mode="edge")
    xflat = xpad.reshape(N, Cin, Mp)
    # Rows ordered (tap k major, cin minor) to match the folded weight columns.  Roll
    # wrap-around only affects halo positions, which the kernel fixes (conv1) or crops.
    xcol = jnp.concatenate([jnp.roll(xflat, -o, axis=-1) for o in offs],
                           axis=1).astype(jnp.bfloat16)           # [N, 9*Cin, Mp]

    # --- fold BN (inference / running stats) into the conv weights ------------------------
    s1, b1 = fold_bn(params["bn1_gamma"], params["bn1_beta"],
                     params["bn1_mean"], params["bn1_var"])
    s2, b2 = fold_bn(params["bn2_gamma"], params["bn2_beta"],
                     params["bn2_mean"], params["bn2_var"])
    # [Cout, 9*Cin], columns ordered (kh, kw, cin); BN scale folded, then bf16 for the MXU.
    w1f = (jnp.transpose(params["conv1_w"], (0, 2, 3, 1)).reshape(C1, 9 * Cin)
           * s1[:, None]).astype(jnp.bfloat16)
    w2f = (jnp.transpose(params["conv2_w"], (0, 2, 3, 1)).reshape(C2, 9 * C1)
           * s2[:, None]).astype(jnp.bfloat16)
    w3f = params["conv3_w"][:, :, 0, 0].astype(jnp.bfloat16)      # [C2_out, C2_in]
    b1c = b1.reshape(C1, 1).astype(jnp.float32)
    b2c = b2.reshape(C2, 1).astype(jnp.float32)
    b3c = params["conv3_b"].reshape(C2, 1).astype(jnp.float32)

    # --- lane masks for the replicate-padding fix (left/right/top/bottom of padded grid) --
    p = jnp.arange(Mp)
    col = p % Wp
    masks = jnp.stack([col == 0, col == Wp - 1,
                       p < Wp, p >= Mp - Wp]).astype(jnp.float32)  # [4, Mp]

    kernel = functools.partial(_fused_submodel_kernel, Wp=Wp, C1=C1)

    out_flat = pl.pallas_call(
        kernel,
        out_shape=jax.ShapeDtypeStruct((N, C2, Mp), jnp.float32),
        grid=(N,),
        in_specs=[
            pl.BlockSpec((None, 9 * Cin, Mp), lambda n: (n, 0, 0)),   # per-image input
            pl.BlockSpec((4, Mp), lambda n: (0, 0)),                  # lane masks
            pl.BlockSpec((C1, 9 * Cin), lambda n: (0, 0)),            # conv1*bn1 weights
            pl.BlockSpec((C1, 1), lambda n: (0, 0)),                  # bn1 shift
            pl.BlockSpec((C2, 9 * C1), lambda n: (0, 0)),             # conv2*bn2 weights
            pl.BlockSpec((C2, 1), lambda n: (0, 0)),                  # bn2 shift
            pl.BlockSpec((C2, C2), lambda n: (0, 0)),                 # conv3 weights
            pl.BlockSpec((C2, 1), lambda n: (0, 0)),                  # conv3 bias
        ],
        out_specs=pl.BlockSpec((None, C2, Mp), lambda n: (n, 0, 0)),
        scratch_shapes=[pltpu.VMEM((9 * C1, Mp), jnp.bfloat16)],      # conv2 im2col
        compiler_params=pltpu.CompilerParams(
            dimension_semantics=("parallel",)),
    )(xcol, masks, w1f, b1c, w2f, b2c, w3f, b3c)

    # Wide padded grid -> crop halo; already channel-major == NCHW (no transpose needed).
    return out_flat.reshape(N, C2, Hp, Wp)[:, :, 1:H + 1, 1:W + 1]


# ----------------------------------------------------------------------------
# Pure-JAX reference (independent formulation) for correctness checking
# ----------------------------------------------------------------------------
def _conv3x3_replicate_ref(x_nhwc, w_oihw):
    H, W = x_nhwc.shape[1], x_nhwc.shape[2]
    xp = jnp.pad(x_nhwc, ((0, 0), (1, 1), (1, 1), (0, 0)), mode="edge")
    y = jnp.zeros(x_nhwc.shape[:3] + (w_oihw.shape[0],), jnp.float32)
    for kh in range(3):
        for kw in range(3):
            y = y + jnp.einsum("nhwc,co->nhwo",
                               xp[:, kh:kh + H, kw:kw + W, :],
                               w_oihw[:, :, kh, kw].T,
                               precision=jax.lax.Precision.HIGHEST)
    return y


def submodel_reference(x_nchw, params):
    x = jnp.transpose(x_nchw, (0, 2, 3, 1)).astype(jnp.float32)
    s1, b1 = fold_bn(params["bn1_gamma"], params["bn1_beta"],
                     params["bn1_mean"], params["bn1_var"])
    s2, b2 = fold_bn(params["bn2_gamma"], params["bn2_beta"],
                     params["bn2_mean"], params["bn2_var"])
    y1 = jnp.maximum(_conv3x3_replicate_ref(x, params["conv1_w"]) * s1 + b1, 0.0)
    y2 = jnp.maximum(_conv3x3_replicate_ref(y1, params["conv2_w"]) * s2 + b2, 0.0)
    y3 = jnp.einsum("nhwc,co->nhwo", y2, params["conv3_w"][:, :, 0, 0].T,
                    precision=jax.lax.Precision.HIGHEST) + params["conv3_b"]
    return jnp.transpose(y3, (0, 3, 1, 2))


# ----------------------------------------------------------------------------
# Deterministic parameter construction (shapes from SubModel.__init__)
# ----------------------------------------------------------------------------
def make_params(key, in_channels, out_channels=20):
    ks = jax.random.split(key, 10)
    p = {
        "conv1_w": 0.1 * jax.random.normal(ks[0], (32, in_channels, 3, 3), jnp.float32),
        "bn1_gamma": 1.0 + 0.1 * jax.random.normal(ks[1], (32,), jnp.float32),
        "bn1_beta": 0.1 * jax.random.normal(ks[2], (32,), jnp.float32),
        "bn1_mean": 0.05 * jax.random.normal(ks[3], (32,), jnp.float32),
        "bn1_var": 1.0 + 0.1 * jax.random.uniform(ks[4], (32,), jnp.float32),
        "conv2_w": 0.1 * jax.random.normal(ks[5], (out_channels, 32, 3, 3), jnp.float32),
        "bn2_gamma": 1.0 + 0.1 * jax.random.normal(ks[6], (out_channels,), jnp.float32),
        "bn2_beta": 0.1 * jax.random.normal(ks[7], (out_channels,), jnp.float32),
        "bn2_mean": 0.05 * jax.random.normal(ks[8], (out_channels,), jnp.float32),
        "bn2_var": 1.0 + 0.1 * jax.random.uniform(ks[9], (out_channels,), jnp.float32),
    }
    k3w, k3b = jax.random.split(jax.random.fold_in(key, 123))
    p["conv3_w"] = 0.1 * jax.random.normal(k3w, (out_channels, out_channels, 1, 1), jnp.float32)
    p["conv3_b"] = 0.1 * jax.random.normal(k3b, (out_channels,), jnp.float32)
    return p


if __name__ == "__main__":
    N, Cin, H, W = 2, 4, 16, 16
    COUT = 20

    key = jax.random.PRNGKey(0)
    kx, kp = jax.random.split(key)
    x = jax.random.normal(kx, (N, Cin, H, W), jnp.float32)
    params = make_params(kp, Cin, COUT)

    out = jax.jit(submodel_forward)(x, params)
    out = jax.block_until_ready(out)
    assert out.shape == (N, COUT, H, W), out.shape
    assert out.dtype == jnp.float32

    ref = submodel_reference(x, params)
    abs_err = jnp.abs(out - ref)
    max_err = float(jnp.max(abs_err))
    mean_err = float(jnp.mean(abs_err))
    scale = float(jnp.max(jnp.abs(ref)))
    assert max_err == max_err, "NaN in kernel output"
    # bf16 MXU inputs with f32 accumulation: allow ~3% of the output dynamic range.
    assert max_err < 3e-2 * max(1.0, scale) + 1e-3, (max_err, scale)
    assert mean_err < 1e-2, mean_err
    print("KERNEL_OK")
</pallas_src>

<mosaic_0001>
module attributes {stable_mosaic.version = 11 : i64} {
  func.func @_fused_submodel_kernel(%arg0: i32, %arg1: memref<1x36x324xbf16, #tpu.memory_space<vmem>>, %arg2: memref<4x324xf32, #tpu.memory_space<vmem>>, %arg3: memref<32x36xbf16, #tpu.memory_space<vmem>>, %arg4: memref<32x1xf32, #tpu.memory_space<vmem>>, %arg5: memref<20x288xbf16, #tpu.memory_space<vmem>>, %arg6: memref<20x1xf32, #tpu.memory_space<vmem>>, %arg7: memref<20x20xbf16, #tpu.memory_space<vmem>>, %arg8: memref<20x1xf32, #tpu.memory_space<vmem>>, %arg9: memref<1x20x324xf32, #tpu.memory_space<vmem>>, %arg10: memref<288x324xbf16, #tpu.memory_space<vmem>>) attributes {dimension_semantics = [#tpu.dimension_semantics<parallel>], iteration_bounds = array<i64: 2>, scalar_prefetch = 0 : i64, scratch_operands = 1 : i64, tpu.core_type = #tpu.core_type<tc>, window_params = [{transform_indices = @transform_0, window_bounds = array<i64: 1, 36, 324>}, {pipeline_mode = #tpu.pipeline_mode<synchronous>, transform_indices = @transform_1, window_bounds = array<i64: 4, 324>}, {pipeline_mode = #tpu.pipeline_mode<synchronous>, transform_indices = @transform_2, window_bounds = array<i64: 32, 36>}, {pipeline_mode = #tpu.pipeline_mode<synchronous>, transform_indices = @transform_3, window_bounds = array<i64: 32, 1>}, {pipeline_mode = #tpu.pipeline_mode<synchronous>, transform_indices = @transform_4, window_bounds = array<i64: 20, 288>}, {pipeline_mode = #tpu.pipeline_mode<synchronous>, transform_indices = @transform_5, window_bounds = array<i64: 20, 1>}, {pipeline_mode = #tpu.pipeline_mode<synchronous>, transform_indices = @transform_6, window_bounds = array<i64: 20, 20>}, {pipeline_mode = #tpu.pipeline_mode<synchronous>, transform_indices = @transform_7, window_bounds = array<i64: 20, 1>}, {transform_indices = @transform_8, window_bounds = array<i64: 1, 20, 324>}]} {
    %c0 = arith.constant 0 : index
    %c0_0 = arith.constant 0 : index
    %0 = vector.load %arg3[%c0, %c0_0] : memref<32x36xbf16, #tpu.memory_space<vmem>>, vector<32x36xbf16>
    %c0_1 = arith.constant 0 : index
    %c0_2 = arith.constant 0 : index
    %c0_3 = arith.constant 0 : index
    %1 = vector.load %arg1[%c0_1, %c0_2, %c0_3] : memref<1x36x324xbf16, #tpu.memory_space<vmem>>, vector<1x36x324xbf16>
    %2 = vector.shape_cast %1 : vector<1x36x324xbf16> to vector<36x324xbf16>
    %cst = arith.constant dense<0.000000e+00> : vector<32x324xf32>
    %3 = tpu.matmul %0, %2, %cst {dimension_numbers = #tpu.dot_dimension_numbers<[1], [0], [0], [1], [0, 0, 1, 1], [], []>} : vector<32x36xbf16>, vector<36x324xbf16>, vector<32x324xf32> -> vector<32x324xf32>
    %c0_4 = arith.constant 0 : index
    %c0_5 = arith.constant 0 : index
    %4 = vector.load %arg4[%c0_4, %c0_5] : memref<32x1xf32, #tpu.memory_space<vmem>>, vector<32x1xf32>
    %5 = vector.broadcast %4 : vector<32x1xf32> to vector<32x324xf32>
    %6 = arith.addf %3, %5 : vector<32x324xf32>
    %cst_6 = arith.constant 0.000000e+00 : f32
    %7 = vector.broadcast %cst_6 : f32 to vector<32x324xf32>
    %8 = arith.maximumf %6, %7 : vector<32x324xf32>
    %c0_7 = arith.constant 0 : index
    %c0_8 = arith.constant 0 : index
    %9 = vector.load %arg2[%c0_7, %c0_8] : memref<4x324xf32, #tpu.memory_space<vmem>>, vector<1x324xf32>
    %cst_9 = arith.constant 5.000000e-01 : f32
    %10 = vector.broadcast %cst_9 : f32 to vector<1x324xf32>
    %11 = arith.cmpf ogt, %9, %10 : vector<1x324xf32>
    %c1 = arith.constant 1 : index
    %c0_10 = arith.constant 0 : index
    %12 = vector.load %arg2[%c1, %c0_10] : memref<4x324xf32, #tpu.memory_space<vmem>>, vector<1x324xf32>
    %cst_11 = arith.constant 5.000000e-01 : f32
    %13 = vector.broadcast %cst_11 : f32 to vector<1x324xf32>
    %14 = arith.cmpf ogt, %12, %13 : vector<1x324xf32>
    %c2 = arith.constant 2 : index
    %c0_12 = arith.constant 0 : index
    %15 = vector.load %arg2[%c2, %c0_12] : memref<4x324xf32, #tpu.memory_space<vmem>>, vector<1x324xf32>
    %cst_13 = arith.constant 5.000000e-01 : f32
    %16 = vector.broadcast %cst_13 : f32 to vector<1x324xf32>
    %17 = arith.cmpf ogt, %15, %16 : vector<1x324xf32>
    %c3 = arith.constant 3 : index
    %c0_14 = arith.constant 0 : index
    %18 = vector.load %arg2[%c3, %c0_14] : memref<4x324xf32, #tpu.memory_space<vmem>>, vector<1x324xf32>
    %cst_15 = arith.constant 5.000000e-01 : f32
    %19 = vector.broadcast %cst_15 : f32 to vector<1x324xf32>
    %20 = arith.cmpf ogt, %18, %19 : vector<1x324xf32>
    %21 = vector.extract_strided_slice %8 {offsets = [0, 1], sizes = [32, 323], strides = [1, 1]} : vector<32x324xf32> to vector<32x323xf32>
    %22 = vector.extract_strided_slice %8 {offsets = [0, 0], sizes = [32, 1], strides = [1, 1]} : vector<32x324xf32> to vector<32x1xf32>
    %23 = tpu.concatenate %21, %22 in 1 : vector<32x323xf32>, vector<32x1xf32> -> vector<32x324xf32>
    %24 = vector.shape_cast %11 : vector<1x324xi1> to vector<1x324xi1>
    %25 = vector.broadcast %24 : vector<1x324xi1> to vector<32x324xi1>
    %26 = arith.select %25, %23, %8 : vector<32x324xi1>, vector<32x324xf32>
    %27 = vector.extract_strided_slice %26 {offsets = [0, 323], sizes = [32, 1], strides = [1, 1]} : vector<32x324xf32> to vector<32x1xf32>
    %28 = vector.extract_strided_slice %26 {offsets = [0, 0], sizes = [32, 323], strides = [1, 1]} : vector<32x324xf32> to vector<32x323xf32>
    %29 = tpu.concatenate %27, %28 in 1 : vector<32x1xf32>, vector<32x323xf32> -> vector<32x324xf32>
    %30 = vector.shape_cast %14 : vector<1x324xi1> to vector<1x324xi1>
    %31 = vector.broadcast %30 : vector<1x324xi1> to vector<32x324xi1>
    %32 = arith.select %31, %29, %26 : vector<32x324xi1>, vector<32x324xf32>
    %33 = vector.extract_strided_slice %32 {offsets = [0, 18], sizes = [32, 306], strides = [1, 1]} : vector<32x324xf32> to vector<32x306xf32>
    %34 = vector.extract_strided_slice %32 {offsets = [0, 0], sizes = [32, 18], strides = [1, 1]} : vector<32x324xf32> to vector<32x18xf32>
    %35 = tpu.concatenate %33, %34 in 1 : vector<32x306xf32>, vector<32x18xf32> -> vector<32x324xf32>
    %36 = vector.shape_cast %17 : vector<1x324xi1> to vector<1x324xi1>
    %37 = vector.broadcast %36 : vector<1x324xi1> to vector<32x324xi1>
    %38 = arith.select %37, %35, %32 : vector<32x324xi1>, vector<32x324xf32>
    %39 = vector.extract_strided_slice %38 {offsets = [0, 306], sizes = [32, 18], strides = [1, 1]} : vector<32x324xf32> to vector<32x18xf32>
    %40 = vector.extract_strided_slice %38 {offsets = [0, 0], sizes = [32, 306], strides = [1, 1]} : vector<32x324xf32> to vector<32x306xf32>
    %41 = tpu.concatenate %39, %40 in 1 : vector<32x18xf32>, vector<32x306xf32> -> vector<32x324xf32>
    %42 = vector.shape_cast %20 : vector<1x324xi1> to vector<1x324xi1>
    %43 = vector.broadcast %42 : vector<1x324xi1> to vector<32x324xi1>
    %44 = arith.select %43, %41, %38 : vector<32x324xi1>, vector<32x324xf32>
    %45 = arith.truncf %44 : vector<32x324xf32> to vector<32x324xbf16>
    %46 = vector.extract_strided_slice %45 {offsets = [0, 305], sizes = [32, 19], strides = [1, 1]} : vector<32x324xbf16> to vector<32x19xbf16>
    %47 = vector.extract_strided_slice %45 {offsets = [0, 0], sizes = [32, 305], strides = [1, 1]} : vector<32x324xbf16> to vector<32x305xbf16>
    %48 = tpu.concatenate %46, %47 in 1 : vector<32x19xbf16>, vector<32x305xbf16> -> vector<32x324xbf16>
    %c0_16 = arith.constant 0 : index
    %c0_17 = arith.constant 0 : index
    %49 = vector.load %arg10[%c0_16, %c0_17] : memref<288x324xbf16, #tpu.memory_space<vmem>>, vector<32x324xbf16>
    tpu.vector_store %arg10[%c0_16, %c0_17], %48 {strides = array<i32>} : memref<288x324xbf16, #tpu.memory_space<vmem>>, vector<32x324xbf16>,
    %50 = vector.extract_strided_slice %45 {offsets = [0, 306], sizes = [32, 18], strides = [1, 1]} : vector<32x324xbf16> to vector<32x18xbf16>
    %51 = vector.extract_strided_slice %45 {offsets = [0, 0], sizes = [32, 306], strides = [1, 1]} : vector<32x324xbf16> to vector<32x306xbf16>
    %52 = tpu.concatenate %50, %51 in 1 : vector<32x18xbf16>, vector<32x306xbf16> -> vector<32x324xbf16>
    %c32 = arith.constant 32 : index
    %c0_18 = arith.constant 0 : index
    %53 = vector.load %arg10[%c32, %c0_18] : memref<288x324xbf16, #tpu.memory_space<vmem>>, vector<32x324xbf16>
    tpu.vector_store %arg10[%c32, %c0_18], %52 {strides = array<i32>} : memref<288x324xbf16, #tpu.memory_space<vmem>>, vector<32x324xbf16>,
    %54 = vector.extract_strided_slice %45 {offsets = [0, 307], sizes = [32, 17], strides = [1, 1]} : vector<32x324xbf16> to vector<32x17xbf16>
    %55 = vector.extract_strided_slice %45 {offsets = [0, 0], sizes = [32, 307], strides = [1, 1]} : vector<32x324xbf16> to vector<32x307xbf16>
    %56 = tpu.concatenate %54, %55 in 1 : vector<32x17xbf16>, vector<32x307xbf16> -> vector<32x324xbf16>
    %c64 = arith.constant 64 : index
    %c0_19 = arith.constant 0 : index
    %57 = vector.load %arg10[%c64, %c0_19] : memref<288x324xbf16, #tpu.memory_space<vmem>>, vector<32x324xbf16>
    tpu.vector_store %arg10[%c64, %c0_19], %56 {strides = array<i32>} : memref<288x324xbf16, #tpu.memory_space<vmem>>, vector<32x324xbf16>,
    %58 = vector.extract_strided_slice %45 {offsets = [0, 323], sizes = [32, 1], strides = [1, 1]} : vector<32x324xbf16> to vector<32x1xbf16>
    %59 = vector.extract_strided_slice %45 {offsets = [0, 0], sizes = [32, 323], strides = [1, 1]} : vector<32x324xbf16> to vector<32x323xbf16>
    %60 = tpu.concatenate %58, %59 in 1 : vector<32x1xbf16>, vector<32x323xbf16> -> vector<32x324xbf16>
    %c96 = arith.constant 96 : index
    %c0_20 = arith.constant 0 : index
    %61 = vector.load %arg10[%c96, %c0_20] : memref<288x324xbf16, #tpu.memory_space<vmem>>, vector<32x324xbf16>
    tpu.vector_store %arg10[%c96, %c0_20], %60 {strides = array<i32>} : memref<288x324xbf16, #tpu.memory_space<vmem>>, vector<32x324xbf16>,
    %c128 = arith.constant 128 : index
    %c0_21 = arith.constant 0 : index
    %62 = vector.load %arg10[%c128, %c0_21] : memref<288x324xbf16, #tpu.memory_space<vmem>>, vector<32x324xbf16>
    tpu.vector_store %arg10[%c128, %c0_21], %45 {strides = array<i32>} : memref<288x324xbf16, #tpu.memory_space<vmem>>, vector<32x324xbf16>,
    %63 = vector.extract_strided_slice %45 {offsets = [0, 1], sizes = [32, 323], strides = [1, 1]} : vector<32x324xbf16> to vector<32x323xbf16>
    %64 = vector.extract_strided_slice %45 {offsets = [0, 0], sizes = [32, 1], strides = [1, 1]} : vector<32x324xbf16> to vector<32x1xbf16>
    %65 = tpu.concatenate %63, %64 in 1 : vector<32x323xbf16>, vector<32x1xbf16> -> vector<32x324xbf16>
    %c160 = arith.constant 160 : index
    %c0_22 = arith.constant 0 : index
    %66 = vector.load %arg10[%c160, %c0_22] : memref<288x324xbf16, #tpu.memory_space<vmem>>, vector<32x324xbf16>
    tpu.vector_store %arg10[%c160, %c0_22], %65 {strides = array<i32>} : memref<288x324xbf16, #tpu.memory_space<vmem>>, vector<32x324xbf16>,
    %67 = vector.extract_strided_slice %45 {offsets = [0, 17], sizes = [32, 307], strides = [1, 1]} : vector<32x324xbf16> to vector<32x307xbf16>
    %68 = vector.extract_strided_slice %45 {offsets = [0, 0], sizes = [32, 17], strides = [1, 1]} : vector<32x324xbf16> to vector<32x17xbf16>
    %69 = tpu.concatenate %67, %68 in 1 : vector<32x307xbf16>, vector<32x17xbf16> -> vector<32x324xbf16>
    %c192 = arith.constant 192 : index
    %c0_23 = arith.constant 0 : index
    %70 = vector.load %arg10[%c192, %c0_23] : memref<288x324xbf16, #tpu.memory_space<vmem>>, vector<32x324xbf16>
    tpu.vector_store %arg10[%c192, %c0_23], %69 {strides = array<i32>} : memref<288x324xbf16, #tpu.memory_space<vmem>>, vector<32x324xbf16>,
    %71 = vector.extract_strided_slice %45 {offsets = [0, 18], sizes = [32, 306], strides = [1, 1]} : vector<32x324xbf16> to vector<32x306xbf16>
    %72 = vector.extract_strided_slice %45 {offsets = [0, 0], sizes = [32, 18], strides = [1, 1]} : vector<32x324xbf16> to vector<32x18xbf16>
    %73 = tpu.concatenate %71, %72 in 1 : vector<32x306xbf16>, vector<32x18xbf16> -> vector<32x324xbf16>
    %c224 = arith.constant 224 : index
    %c0_24 = arith.constant 0 : index
    %74 = vector.load %arg10[%c224, %c0_24] : memref<288x324xbf16, #tpu.memory_space<vmem>>, vector<32x324xbf16>
    tpu.vector_store %arg10[%c224, %c0_24], %73 {strides = array<i32>} : memref<288x324xbf16, #tpu.memory_space<vmem>>, vector<32x324xbf16>,
    %75 = vector.extract_strided_slice %45 {offsets = [0, 19], sizes = [32, 305], strides = [1, 1]} : vector<32x324xbf16> to vector<32x305xbf16>
    %76 = vector.extract_strided_slice %45 {offsets = [0, 0], sizes = [32, 19], strides = [1, 1]} : vector<32x324xbf16> to vector<32x19xbf16>
    %77 = tpu.concatenate %75, %76 in 1 : vector<32x305xbf16>, vector<32x19xbf16> -> vector<32x324xbf16>
    %c256 = arith.constant 256 : index
    %c0_25 = arith.constant 0 : index
    %78 = vector.load %arg10[%c256, %c0_25] : memref<288x324xbf16, #tpu.memory_space<vmem>>, vector<32x324xbf16>
    tpu.vector_store %arg10[%c256, %c0_25], %77 {strides = array<i32>} : memref<288x324xbf16, #tpu.memory_space<vmem>>, vector<32x324xbf16>,
    %c0_26 = arith.constant 0 : index
    %c0_27 = arith.constant 0 : index
    %79 = vector.load %arg5[%c0_26, %c0_27] : memref<20x288xbf16, #tpu.memory_space<vmem>>, vector<20x288xbf16>
    %c0_28 = arith.constant 0 : index
    %c0_29 = arith.constant 0 : index
    %80 = vector.load %arg10[%c0_28, %c0_29] : memref<288x324xbf16, #tpu.memory_space<vmem>>, vector<288x324xbf16>
    %cst_30 = arith.constant dense<0.000000e+00> : vector<20x324xf32>
    %81 = tpu.matmul %79, %80, %cst_30 {dimension_numbers = #tpu.dot_dimension_numbers<[1], [0], [0], [1], [0, 0, 1, 1], [], []>} : vector<20x288xbf16>, vector<288x324xbf16>, vector<20x324xf32> -> vector<20x324xf32>
    %c0_31 = arith.constant 0 : index
    %c0_32 = arith.constant 0 : index
    %82 = vector.load %arg6[%c0_31, %c0_32] : memref<20x1xf32, #tpu.memory_space<vmem>>, vector<20x1xf32>
    %83 = vector.broadcast %82 : vector<20x1xf32> to vector<20x324xf32>
    %84 = arith.addf %81, %83 : vector<20x324xf32>
    %cst_33 = arith.constant 0.000000e+00 : f32
    %85 = vector.broadcast %cst_33 : f32 to vector<20x324xf32>
    %86 = arith.maximumf %84, %85 : vector<20x324xf32>
    %c0_34 = arith.constant 0 : index
    %c0_35 = arith.constant 0 : index
    %87 = vector.load %arg7[%c0_34, %c0_35] : memref<20x20xbf16, #tpu.memory_space<vmem>>, vector<20x20xbf16>
    %88 = arith.truncf %86 : vector<20x324xf32> to vector<20x324xbf16>
    %cst_36 = arith.constant dense<0.000000e+00> : vector<20x324xf32>
    %89 = tpu.matmul %87, %88, %cst_36 {dimension_numbers = #tpu.dot_dimension_numbers<[1], [0], [0], [1], [0, 0, 1, 1], [], []>} : vector<20x20xbf16>, vector<20x324xbf16>, vector<20x324xf32> -> vector<20x324xf32>
    %c0_37 = arith.constant 0 : index
    %c0_38 = arith.constant 0 : index
    %90 = vector.load %arg8[%c0_37, %c0_38] : memref<20x1xf32, #tpu.memory_space<vmem>>, vector<20x1xf32>
    %91 = vector.broadcast %90 : vector<20x1xf32> to vector<20x324xf32>
    %92 = arith.addf %89, %91 : vector<20x324xf32>
    %c0_39 = arith.constant 0 : index
    %c0_40 = arith.constant 0 : index
    %c0_41 = arith.constant 0 : index
    %93 = vector.load %arg9[%c0_39, %c0_40, %c0_41] : memref<1x20x324xf32, #tpu.memory_space<vmem>>, vector<1x20x324xf32>
    %94 = vector.shape_cast %93 : vector<1x20x324xf32> to vector<20x324xf32>
    %95 = vector.shape_cast %92 : vector<20x324xf32> to vector<1x20x324xf32>
    tpu.vector_store %arg9[%c0_39, %c0_40, %c0_41], %95 {strides = array<i32>} : memref<1x20x324xf32, #tpu.memory_space<vmem>>, vector<1x20x324xf32>,
    return
  }
  func.func @transform_0(%arg0: i32) -> (i32, i32, i32) {
    %c0_i32 = arith.constant 0 : i32
    %c0_i32_0 = arith.constant 0 : i32
    %c0_i32_1 = arith.constant 0 : i32
    return %arg0, %c0_i32, %c0_i32_0 : i32, i32, i32
  }
  func.func @transform_1(%arg0: i32) -> (i32, i32) {
    %c0_i32 = arith.constant 0 : i32
    %c0_i32_0 = arith.constant 0 : i32
    %c0_i32_1 = arith.constant 0 : i32
    return %c0_i32, %c0_i32_0 : i32, i32
  }
  func.func @transform_2(%arg0: i32) -> (i32, i32) {
    %c0_i32 = arith.constant 0 : i32
    %c0_i32_0 = arith.constant 0 : i32
    %c0_i32_1 = arith.constant 0 : i32
    return %c0_i32, %c0_i32_0 : i32, i32
  }
  func.func @transform_3(%arg0: i32) -> (i32, i32) {
    %c0_i32 = arith.constant 0 : i32
    %c0_i32_0 = arith.constant 0 : i32
    %c0_i32_1 = arith.constant 0 : i32
    return %c0_i32, %c0_i32_0 : i32, i32
  }
  func.func @transform_4(%arg0: i32) -> (i32, i32) {
    %c0_i32 = arith.constant 0 : i32
    %c0_i32_0 = arith.constant 0 : i32
    %c0_i32_1 = arith.constant 0 : i32
    return %c0_i32, %c0_i32_0 : i32, i32
  }
  func.func @transform_5(%arg0: i32) -> (i32, i32) {
    %c0_i32 = arith.constant 0 : i32
    %c0_i32_0 = arith.constant 0 : i32
    %c0_i32_1 = arith.constant 0 : i32
    return %c0_i32, %c0_i32_0 : i32, i32
  }
  func.func @transform_6(%arg0: i32) -> (i32, i32) {
    %c0_i32 = arith.constant 0 : i32
    %c0_i32_0 = arith.constant 0 : i32
    %c0_i32_1 = arith.constant 0 : i32
    return %c0_i32, %c0_i32_0 : i32, i32
  }
  func.func @transform_7(%arg0: i32) -> (i32, i32) {
    %c0_i32 = arith.constant 0 : i32
    %c0_i32_0 = arith.constant 0 : i32
    %c0_i32_1 = arith.constant 0 : i32
    return %c0_i32, %c0_i32_0 : i32, i32
  }
  func.func @transform_8(%arg0: i32) -> (i32, i32, i32) {
    %c0_i32 = arith.constant 0 : i32
    %c0_i32_0 = arith.constant 0 : i32
    %c0_i32_1 = arith.constant 0 : i32
    return %arg0, %c0_i32, %c0_i32_0 : i32, i32, i32
  }
}

</mosaic_0001>

<llo_original>
// kernel: submodel_forward.1
$region0: #{submodel_forward.1}
  #allocation0 [shape = 'u32[]', space=smem, size = 0x4, offset = 0x4, fixed_abs, tag = 'smem constant byte address 0x4 - core index']
  #allocation1 [shape = 'u32[144,128]{1,0:T(1,128)}', space=vmem, size = 0x12000, scoped, tag = 'internal scratch']
  #allocation2 [shape = 'bf16[288,324]{1,0:T(16,128)(2,1)}', space=vmem, size = 0x36000, scoped, tag = 'scratch operand']
  %s0 = inlined_call_operand.vmem [shape: bf16[2,36,324], index: 0, kind: input, shape index: {}]
  %s1 = inlined_call_operand.vmem [shape: f32[4,324], index: 1, kind: input, shape index: {}]
  %s2 = inlined_call_operand.vmem [shape: bf16[32,36], index: 2, kind: input, shape index: {}]
  %s3 = inlined_call_operand.vmem [shape: f32[32,1], index: 3, kind: input, shape index: {}]
  %s4 = inlined_call_operand.vmem [shape: bf16[20,288], index: 4, kind: input, shape index: {}]
  %s5 = inlined_call_operand.vmem [shape: f32[20,1], index: 5, kind: input, shape index: {}]
  %s6 = inlined_call_operand.vmem [shape: bf16[20,20], index: 6, kind: input, shape index: {}]
  %s7 = inlined_call_operand.vmem [shape: f32[20,1], index: 7, kind: input, shape index: {}]
  %s8 = inlined_call_operand.vmem [shape: f32[2,20,324], index: 8, kind: output, shape index: {}]
  %s9 = sld [smem:[#allocation0]]
  $region65: #{submodel_forward.1} parent=0
    _
  %s11 = ssub.s32 1, %s9
  %s12 = scalar_select 0, %s11, %s9
  loop: start=0, step=1, limit=4
  $region2: #{submodel_forward.1} parent=0 // loop_pre_header
    _
  $region3: #{submodel_forward.1} parent=0 // loop_header
    %s14 = sphi 0, %s18
    %p15 = scmp.ge.s32.totalorder %s14, 4
    %s24 = sphi 0, %s26
    %s27 = sphi 0, %s24
    %s28 = sphi 0, %s27
    %s44 = sphi 0, %s28
    %s48 = sphi 0, %s48
    %s50 = sphi 0, %s48
    %s51 = sphi 0, %s50
    %s65 = sphi 0, %s51
    %s69 = sphi 0, %s69
    %s71 = sphi 0, %s69
    %s72 = sphi 0, %s71
    %s86 = sphi 0, %s72
    %s90 = sphi 0, %s90
    %s92 = sphi 0, %s90
    %s93 = sphi 0, %s92
    %s107 = sphi 0, %s93
    %s111 = sphi 0, %s111
    %s113 = sphi 0, %s111
    %s114 = sphi 0, %s113
    %s128 = sphi 0, %s114
    %s132 = sphi 0, %s132
    %s134 = sphi 0, %s132
    %s135 = sphi 0, %s134
    %s149 = sphi 0, %s135
    %s153 = sphi 0, %s153
    %s155 = sphi 0, %s153
    %s156 = sphi 0, %s155
    %s170 = sphi 0, %s156
    %s174 = sphi 0, %s174
    %s176 = sphi 0, %s174
    %s177 = sphi 0, %s176
    %s191 = sphi 0, %s177
    %s197 = sphi 0, %s199
    %s200 = sphi 0, %s197
    %s201 = sphi 0, %s200
    %s217 = sphi 0, %s201
  $region4: #{submodel_forward.1} parent=0 // loop_header_branch
    %17 = sbr.rel (%p15) target = $region8
  $region5: #{submodel_forward.1} parent=0 // loop_body
    %s19 = ssub.s32 %s14, 1
    %s20 = ssub.s32 %s14, 2
    %s21 = sadd.s32 %s14, 1
    %s22 = ssub.s32 %s14, %s21
    %p23 = scmp.eq.s32.totalorder %s22, 0
    %s25 = sadd.s32 %s24, 1
    %s26 = scalar_select %p23, %s24, %s25
    %p29 = pneg %p23
    %p30 = scmp.eq.s32.totalorder %s14, 1
    %p31 = por %p29, %p30
    %p32 = scmp.ne.s32.totalorder %s24, %s27
    %p33 = scmp.eq.s32.totalorder %s14, 0
    %p34 = por %p32, %p33
    %p35 = scmp.ne.s32.totalorder %s24, %s27
    %p36 = scmp.eq.s32.totalorder %s19, 1
    %p37 = por %p35, %p36
    %p38 = scmp.ne.s32.totalorder %s27, %s28
    %p39 = scmp.eq.s32.totalorder %s19, 0
    %p40 = por %p38, %p39
    %p41 = scmp.ne.s32.totalorder %s27, %s28
    %p42 = scmp.eq.s32.totalorder %s20, 1
    %p43 = por %p41, %p42
    %p45 = scmp.ne.s32.totalorder %s28, %s44
    %p46 = scmp.eq.s32.totalorder %s20, 0
    %p47 = por %p45, %p46
    %s49 = sadd.s32 %s48, 1
    %p52 = scmp.eq.s32.totalorder %s14, 1
    %p53 = scmp.ne.s32.totalorder %s48, %s50
    %p54 = scmp.eq.s32.totalorder %s14, 0
    %p55 = por %p53, %p54
    %p56 = scmp.ne.s32.totalorder %s48, %s50
    %p57 = scmp.eq.s32.totalorder %s19, 1
    %p58 = por %p56, %p57
    %p59 = scmp.ne.s32.totalorder %s50, %s51
    %p60 = scmp.eq.s32.totalorder %s19, 0
    %p61 = por %p59, %p60
    %p62 = scmp.ne.s32.totalorder %s50, %s51
    %p63 = scmp.eq.s32.totalorder %s20, 1
    %p64 = por %p62, %p63
    %p66 = scmp.ne.s32.totalorder %s51, %s65
    %p67 = scmp.eq.s32.totalorder %s20, 0
    %p68 = por %p66, %p67
    %s70 = sadd.s32 %s69, 1
    %p73 = scmp.eq.s32.totalorder %s14, 1
    %p74 = scmp.ne.s32.totalorder %s69, %s71
    %p75 = scmp.eq.s32.totalorder %s14, 0
    %p76 = por %p74, %p75
    %p77 = scmp.ne.s32.totalorder %s69, %s71
    %p78 = scmp.eq.s32.totalorder %s19, 1
    %p79 = por %p77, %p78
    %p80 = scmp.ne.s32.totalorder %s71, %s72
    %p81 = scmp.eq.s32.totalorder %s19, 0
    %p82 = por %p80, %p81
    %p83 = scmp.ne.s32.totalorder %s71, %s72
    %p84 = scmp.eq.s32.totalorder %s20, 1
    %p85 = por %p83, %p84
    %p87 = scmp.ne.s32.totalorder %s72, %s86
    %p88 = scmp.eq.s32.totalorder %s20, 0
    %p89 = por %p87, %p88
    %s91 = sadd.s32 %s90, 1
    %p94 = scmp.eq.s32.totalorder %s14, 1
    %p95 = scmp.ne.s32.totalorder %s90, %s92
    %p96 = scmp.eq.s32.totalorder %s14, 0
    %p97 = por %p95, %p96
    %p98 = scmp.ne.s32.totalorder %s90, %s92
    %p99 = scmp.eq.s32.totalorder %s19, 1
    %p100 = por %p98, %p99
    %p101 = scmp.ne.s32.totalorder %s92, %s93
    %p102 = scmp.eq.s32.totalorder %s19, 0
    %p103 = por %p101, %p102
    %p104 = scmp.ne.s32.totalorder %s92, %s93
    %p105 = scmp.eq.s32.totalorder %s20, 1
    %p106 = por %p104, %p105
    %p108 = scmp.ne.s32.totalorder %s93, %s107
    %p109 = scmp.eq.s32.totalorder %s20, 0
    %p110 = por %p108, %p109
    %s112 = sadd.s32 %s111, 1
    %p115 = scmp.eq.s32.totalorder %s14, 1
    %p116 = scmp.ne.s32.totalorder %s111, %s113
    %p117 = scmp.eq.s32.totalorder %s14, 0
    %p118 = por %p116, %p117
    %p119 = scmp.ne.s32.totalorder %s111, %s113
    %p120 = scmp.eq.s32.totalorder %s19, 1
    %p121 = por %p119, %p120
    %p122 = scmp.ne.s32.totalorder %s113, %s114
    %p123 = scmp.eq.s32.totalorder %s19, 0
    %p124 = por %p122, %p123
    %p125 = scmp.ne.s32.totalorder %s113, %s114
    %p126 = scmp.eq.s32.totalorder %s20, 1
    %p127 = por %p125, %p126
    %p129 = scmp.ne.s32.totalorder %s114, %s128
    %p130 = scmp.eq.s32.totalorder %s20, 0
    %p131 = por %p129, %p130
    %s133 = sadd.s32 %s132, 1
    %p136 = scmp.eq.s32.totalorder %s14, 1
    %p137 = scmp.ne.s32.totalorder %s132, %s134
    %p138 = scmp.eq.s32.totalorder %s14, 0
    %p139 = por %p137, %p138
    %p140 = scmp.ne.s32.totalorder %s132, %s134
    %p141 = scmp.eq.s32.totalorder %s19, 1
    %p142 = por %p140, %p141
    %p143 = scmp.ne.s32.totalorder %s134, %s135
    %p144 = scmp.eq.s32.totalorder %s19, 0
    %p145 = por %p143, %p144
    %p146 = scmp.ne.s32.totalorder %s134, %s135
    %p147 = scmp.eq.s32.totalorder %s20, 1
    %p148 = por %p146, %p147
    %p150 = scmp.ne.s32.totalorder %s135, %s149
    %p151 = scmp.eq.s32.totalorder %s20, 0
    %p152 = por %p150, %p151
    %s154 = sadd.s32 %s153, 1
    %p157 = scmp.eq.s32.totalorder %s14, 1
    %p158 = scmp.ne.s32.totalorder %s153, %s155
    %p159 = scmp.eq.s32.totalorder %s14, 0
    %p160 = por %p158, %p159
    %p161 = scmp.ne.s32.totalorder %s153, %s155
    %p162 = scmp.eq.s32.totalorder %s19, 1
    %p163 = por %p161, %p162
    %p164 = scmp.ne.s32.totalorder %s155, %s156
    %p165 = scmp.eq.s32.totalorder %s19, 0
    %p166 = por %p164, %p165
    %p167 = scmp.ne.s32.totalorder %s155, %s156
    %p168 = scmp.eq.s32.totalorder %s20, 1
    %p169 = por %p167, %p168
    %p171 = scmp.ne.s32.totalorder %s156, %s170
    %p172 = scmp.eq.s32.totalorder %s20, 0
    %p173 = por %p171, %p172
    %s175 = sadd.s32 %s174, 1
    %p178 = scmp.eq.s32.totalorder %s14, 1
    %p179 = scmp.ne.s32.totalorder %s174, %s176
    %p180 = scmp.eq.s32.totalorder %s14, 0
    %p181 = por %p179, %p180
    %p182 = scmp.ne.s32.totalorder %s174, %s176
    %p183 = scmp.eq.s32.totalorder %s19, 1
    %p184 = por %p182, %p183
    %p185 = scmp.ne.s32.totalorder %s176, %s177
    %p186 = scmp.eq.s32.totalorder %s19, 0
    %p187 = por %p185, %p186
    %p188 = scmp.ne.s32.totalorder %s176, %s177
    %p189 = scmp.eq.s32.totalorder %s20, 1
    %p190 = por %p188, %p189
    %p192 = scmp.ne.s32.totalorder %s177, %s191
    %p193 = scmp.eq.s32.totalorder %s20, 0
    %p194 = por %p192, %p193
    %s195 = ssub.s32 %s14, %s21
    %p196 = scmp.eq.s32.totalorder %s195, 0
    %s198 = sadd.s32 %s197, 1
    %s199 = scalar_select %p196, %s197, %s198
    %p202 = pneg %p196
    %p203 = scmp.eq.s32.totalorder %s14, 1
    %p204 = por %p202, %p203
    %p205 = scmp.ne.s32.totalorder %s197, %s200
    %p206 = scmp.eq.s32.totalorder %s14, 0
    %p207 = por %p205, %p206
    %p208 = scmp.ne.s32.totalorder %s197, %s200
    %p209 = scmp.eq.s32.totalorder %s19, 1
    %p210 = por %p208, %p209
    %p211 = scmp.ne.s32.totalorder %s200, %s201
    %p212 = scmp.eq.s32.totalorder %s19, 0
    %p213 = por %p211, %p212
    %p214 = scmp.ne.s32.totalorder %s200, %s201
    %p215 = scmp.eq.s32.totalorder %s20, 1
    %p216 = por %p214, %p215
    %p218 = scmp.ne.s32.totalorder %s201, %s217
    %p219 = scmp.eq.s32.totalorder %s20, 0
    %p220 = por %p218, %p219
    %p221 = scmp.le.s32.totalorder 1, %s14
    %p222 = scmp.lt.s32.totalorder %s14, 3
    %p223 = pnand %p221, %p222
    %p224 = pneg %p223
    // Predicated region
    $region9: #{submodel_forward.1} parent=5 // pred_check
      _
    $region10: #{submodel_forward.1} parent=5 // pred_check_branch
      %226 = sbr.rel (%p223) target = $region12
    $region11: #{submodel_forward.1} parent=5 // pred_region
      %s227 = ssub.s32 %s14, 1
      // Predicated region
      $region13: #{submodel_forward.1} parent=11 // pred_check
        %p228 = pneg %p61
      $region14: #{submodel_forward.1} parent=11 // pred_check_branch
        %230 = sbr.rel (%p228) target = $region16
      $region15: #{submodel_forward.1} parent=11 // pred_region
        _
      $region16: #{submodel_forward.1} parent=11 // pred_fallthru
        _
      // Predicated region
      $region17: #{submodel_forward.1} parent=11 // pred_check
        %p231 = pneg %p82
      $region18: #{submodel_forward.1} parent=11 // pred_check_branch
        %233 = sbr.rel (%p231) target = $region20
      $region19: #{submodel_forward.1} parent=11 // pred_region
        _
      $region20: #{submodel_forward.1} parent=11 // pred_fallthru
        _
      // Predicated region
      $region21: #{submodel_forward.1} parent=11 // pred_check
        %p234 = pneg %p103
      $region22: #{submodel_forward.1} parent=11 // pred_check_branch
        %236 = sbr.rel (%p234) target = $region24
      $region23: #{submodel_forward.1} parent=11 // pred_region
        _
      $region24: #{submodel_forward.1} parent=11 // pred_fallthru
        _
      // Predicated region
      $region25: #{submodel_forward.1} parent=11 // pred_check
        %p237 = pneg %p124
      $region26: #{submodel_forward.1} parent=11 // pred_check_branch
        %239 = sbr.rel (%p237) target = $region28
      $region27: #{submodel_forward.1} parent=11 // pred_region
        _
      $region28: #{submodel_forward.1} parent=11 // pred_fallthru
        _
      // Predicated region
      $region29: #{submodel_forward.1} parent=11 // pred_check
        %p240 = pneg %p145
      $region30: #{submodel_forward.1} parent=11 // pred_check_branch
        %242 = sbr.rel (%p240) target = $region32
      $region31: #{submodel_forward.1} parent=11 // pred_region
        _
      $region32: #{submodel_forward.1} parent=11 // pred_fallthru
        _
      // Predicated region
      $region33: #{submodel_forward.1} parent=11 // pred_check
        %p243 = pneg %p166
      $region34: #{submodel_forward.1} parent=11 // pred_check_branch
        %245 = sbr.rel (%p243) target = $region36
      $region35: #{submodel_forward.1} parent=11 // pred_region
        _
      $region36: #{submodel_forward.1} parent=11 // pred_fallthru
        _
      // Predicated region
      $region37: #{submodel_forward.1} parent=11 // pred_check
        %p246 = pneg %p187
      $region38: #{submodel_forward.1} parent=11 // pred_check_branch
        %248 = sbr.rel (%p246) target = $region40
      $region39: #{submodel_forward.1} parent=11 // pred_region
        _
      $region40: #{submodel_forward.1} parent=11 // pred_fallthru
        _
    $region12: #{submodel_forward.1} parent=5 // pred_fallthru
      _
    %p249 = scmp.lt.s32.totalorder %s14, 2
    // Predicated region
    $region41: #{submodel_forward.1} parent=5 // pred_check
      %p250 = pneg %p249
    $region42: #{submodel_forward.1} parent=5 // pred_check_branch
      %252 = sbr.rel (%p250) target = $region44
    $region43: #{submodel_forward.1} parent=5 // pred_region
      // Predicated region
      $region45: #{submodel_forward.1} parent=43 // pred_check
        %p253 = pneg %p34
      $region46: #{submodel_forward.1} parent=43 // pred_check_branch
        %255 = sbr.rel (%p253) target = $region48
      $region47: #{submodel_forward.1} parent=43 // pred_region
        %p256 = scmp.lt.s32.totalorder %s14, 1
        %s257 = scalar_select %p256, %s14, 1
        %s258 = smul.addr %s257, 15
        %s259 = smul.addr %s258, 4
        %s260 = scalar_lea.vmem %s0, %s259
      $region48: #{submodel_forward.1} parent=43 // pred_fallthru
        _
    $region44: #{submodel_forward.1} parent=5 // pred_fallthru
      _
    %p261 = scmp.le.s32.totalorder 1, %s14
    %p262 = scmp.lt.s32.totalorder %s14, 3
    %p263 = pnand %p261, %p262
    %p264 = pneg %p263
    // Predicated region
    $region49: #{submodel_forward.1} parent=5 // pred_check
      _
    $region50: #{submodel_forward.1} parent=5 // pred_check_branch
      %266 = sbr.rel (%p263) target = $region52
    $region51: #{submodel_forward.1} parent=5 // pred_region
      %s267 = ssub.s32 %s14, 1
      %p268 = scmp.lt.s32.totalorder %s19, 1
      %s269 = scalar_select %p268, %s19, 1
      %s270 = smul.addr %s269, 15
      %s271 = smul.addr %s270, 4
      %s272 = scalar_lea.vmem %s0, %s271
      %p273 = pneg %p40
      %p274 = pneg %p37
      %p275 = pneg %p61
      %p276 = pneg %p58
      %p277 = pneg %p82
      %p278 = pneg %p79
      %p279 = pneg %p103
      %p280 = pneg %p100
      %p281 = pneg %p124
      %p282 = pneg %p121
      %p283 = pneg %p145
      %p284 = pneg %p142
      %p285 = pneg %p166
      %p286 = pneg %p163
      %p287 = pneg %p187
      %p288 = pneg %p184
      %p289 = pneg %p213
      %p290 = pneg %p210
      %p291 = scmp.lt.s32.totalorder %s19, 1
      %s292 = scalar_select %p291, %s19, 1
      %s293 = smul.addr %s292, 9
      %s294 = smul.addr %s293, 8
      %s295 = scalar_lea.vmem %s8, %s294
      %p296 = scmp.lt.s32.totalorder %s19, 1
      %s297 = scalar_select %p296, %s19, 1
      %s298 = smul.addr %s297, 15
      %s299 = smul.addr %s298, 4
      %s300 = scalar_lea.vmem %s0, %s299
      %p301 = scmp.lt.s32.totalorder %s19, 1
      %s302 = scalar_select %p301, %s19, 1
      %s303 = smul.addr %s302, 9
      %s304 = smul.addr %s303, 8
      %s305 = scalar_lea.vmem %s8, %s304
      %v307 = vld [vmem:[%s2] sm:$0xf]
      %v308 = vld [vmem:[%s2 + $0x4] sm:$0xf]
      %v309 = vld [vmem:[%s2 + $0x8] sm:$0xf]
      %v310 = vld [vmem:[%s2 + $0xc] sm:$0xf]
      %v311 = vld [vmem:[%s300] sm:$0xff]
      %v312 = vld [vmem:[%s300 + $0x8] sm:$0xf]
      %v313 = vld [vmem:[%s300 + $0xc] sm:$0xff]
      %v314 = vld [vmem:[%s300 + $0x14] sm:$0xf]
      %v315 = vld [vmem:[%s300 + $0x18] sm:$0xff]
      %v316 = vld [vmem:[%s300 + $0x20] sm:$0xf]
      %v317 = vld [vmem:[%s300 + $0x24] sm:$0xff]
      %v318 = vld [vmem:[%s300 + $0x2c] sm:$0xf]
      %v319 = vld [vmem:[%s300 + $0x30] sm:$0x33]
      %v320 = vld [vmem:[%s300 + $0x38] sm:$0x3]
      %v321 = vld [vmem:[%s3] sm:$0xff]
      %v322 = vld [vmem:[%s3 + $0x8] sm:$0xff]
      %v323 = vld [vmem:[%s3 + $0x10] sm:$0xff]
      %v324 = vld [vmem:[%s3 + $0x18] sm:$0xff]
      %326 = vset.pattern.permute.xlu0 0
      %327 = vperm.xlu0 %326, %v321
      %v328 = vpop.permute.xlu0 %327
      %331 = vset.pattern.permute.xlu0 0
      %332 = vperm.xlu0 %331, %v322
      %v333 = vpop.permute.xlu0 %332
      %336 = vset.pattern.permute.xlu0 0
      %337 = vperm.xlu0 %336, %v323
      %v338 = vpop.permute.xlu0 %337
      %341 = vset.pattern.permute.xlu0 0
      %342 = vperm.xlu0 %341, %v324
      %v343 = vpop.permute.xlu0 %342
      %v349 = vunpack.c.l.b16 %v307
      %v350 = vunpack.c.l.b16 %v308
      %v351 = vunpack.c.l.b16 %v309
      %v352 = vunpack.c.l.b16 %v310
      %v353 = vpack.c.b16 %v350, %v349
      %v354 = vpack.c.b16 %v352, %v351
      %v365 = vunpack.c.l.b16 %v311
      %v366 = vunpack.c.h.b16 %v311
      %v367 = vunpack.c.l.b16 %v312
      %v368 = vunpack.c.l.b16 %v313
      %v369 = vunpack.c.h.b16 %v313
      %v370 = vunpack.c.l.b16 %v314
      %v371 = vunpack.c.l.b16 %v315
      %v372 = vunpack.c.h.b16 %v315
      %v373 = vunpack.c.l.b16 %v316
      %v374 = vunpack.c.l.b16 %v317
      %v375 = vunpack.c.h.b16 %v317
      %v376 = vunpack.c.l.b16 %v318
      %v377 = vunpack.c.l.b16 %v319
      %v378 = vunpack.c.h.b16 %v319
      %v379 = vunpack.c.l.b16 %v320
      %v380 = vpack.c.b16 %v368, %v365
      %v381 = vpack.c.b16 %v369, %v366
      %v382 = vpack.c.b16 %v370, %v367
      %v383 = vpack.c.b16 %v374, %v371
      %v384 = vpack.c.b16 %v375, %v372
      %v385 = vpack.c.b16 %v376, %v373
      %v386 = vpack.c.b16 %v377, %v377
      %v387 = vpack.c.b16 %v378, %v378
      %v388 = vpack.c.b16 %v379, %v379
      %vm395 = vcmask 293888
      %v397 = vsel %vm395, %v353, 0
      %v400 = vsel %vm395, %v354, 0
      %vm402 = vcmask 1041408
      %v404 = vsel %vm402, %v386, 0
      %v407 = vsel %vm402, %v387, 0
      %v410 = vsel %vm402, %v388, 0
      %412 = vmatprep.subr.bf16.mxu0 %v381
      %413 = vmatpush1.bf16.msra.mxu0 %v380
      %414 = vmatprep.subr.bf16.mxu0 %v384
      %415 = vmatpush1.bf16.msra.mxu0 %v383
      %416 = vmatprep.subr.bf16.mxu0 %v407
      %417 = vmatpush1.bf16.msra.mxu0 %v404
      %418 = vmatprep.subr.bf16.mxu0 0
      %419 = vmatpush1.bf16.msra.mxu0 0
      %420 = vmatprep.subr.bf16.mxu0 0
      %421 = vmatpush1.bf16.msra.mxu0 0
      %422 = vmatprep.subr.bf16.mxu0 0
      %423 = vmatpush1.bf16.msra.mxu0 0
      %424 = vmatprep.subr.bf16.mxu0 0
      %425 = vmatpush1.bf16.msra.mxu0 0
      %426 = vmatprep.subr.bf16.mxu0 0
      %427 = vmatpush1.bf16.msra.mxu0 0
      %428 = vmatprep.subr.bf16.mxu0 0
      %429 = vmatpush1.bf16.msra.mxu0 0
      %430 = vmatprep.subr.bf16.mxu0 0
      %431 = vmatpush1.bf16.msra.mxu0 0
      %432 = vmatprep.subr.bf16.mxu0 0
      %433 = vmatpush1.bf16.msra.mxu0 0
      %434 = vmatprep.subr.bf16.mxu0 0
      %435 = vmatpush1.bf16.msra.mxu0 0
      %436 = vmatprep.subr.bf16.mxu0 0
      %437 = vmatpush1.bf16.msra.mxu0 0
      %438 = vmatprep.subr.bf16.mxu0 0
      %439 = vmatpush1.bf16.msra.mxu0 0
      %440 = vmatprep.subr.bf16.mxu0 0
      %441 = vmatpush1.bf16.msra.mxu0 0
      %442 = vmatprep.subr.bf16.mxu0 0
      %443 = vmatpush1.bf16.msra.mxu0 0
      %444 = vmatprep.mubr.bf16.mxu0 0
      %445 = vmatmul.mubr.bf16.gmra.mrb[0].mxu0 %v397
      %v446 = vpop.f32.mrb[0].mxu0
      %v447 = vadd.f32 %v328, %v446
      %v448 = vpop.f32.mrb[0].mxu0
      %v449 = vadd.f32 %v328, %v448
      %v450 = vpop.f32.mrb[0].mxu0
      %v451 = vadd.f32 %v333, %v450
      %v452 = vpop.f32.mrb[0].mxu0
      %v453 = vadd.f32 %v333, %v452
      %454 = vmatprep.mubr.bf16.mxu0 0
      %455 = vmatmul.mubr.bf16.gmra.mrb[0].mxu0 %v400
      %v456 = vpop.f32.mrb[0].mxu0
      %v457 = vadd.f32 %v338, %v456
      %v458 = vpop.f32.mrb[0].mxu0
      %v459 = vadd.f32 %v338, %v458
      %v460 = vpop.f32.mrb[0].mxu0
      %v461 = vadd.f32 %v343, %v460
      %v462 = vpop.f32.mrb[0].mxu0
      %v463 = vadd.f32 %v343, %v462
      %464 = vdwg.mxu0
      %465 = vmatprep.subr.bf16.mxu0 0
      %466 = vmatpush1.bf16.msra.mxu0 %v382
      %467 = vmatprep.subr.bf16.mxu0 0
      %468 = vmatpush1.bf16.msra.mxu0 %v385
      %469 = vmatprep.subr.bf16.mxu0 0
      %470 = vmatpush1.bf16.msra.mxu0 %v410
      %471 = vmatprep.subr.bf16.mxu0 0
      %472 = vmatpush1.bf16.msra.mxu0 0
      %473 = vmatprep.subr.bf16.mxu0 0
      %474 = vmatpush1.bf16.msra.mxu0 0
      %475 = vmatprep.subr.bf16.mxu0 0
      %476 = vmatpush1.bf16.msra.mxu0 0
      %477 = vmatprep.subr.bf16.mxu0 0
      %478 = vmatpush1.bf16.msra.mxu0 0
      %479 = vmatprep.subr.bf16.mxu0 0
      %480 = vmatpush1.bf16.msra.mxu0 0
      %481 = vmatprep.subr.bf16.mxu0 0
      %482 = vmatpush1.bf16.msra.mxu0 0
      %483 = vmatprep.subr.bf16.mxu0 0
      %484 = vmatpush1.bf16.msra.mxu0 0
      %485 = vmatprep.subr.bf16.mxu0 0
      %486 = vmatpush1.bf16.msra.mxu0 0
      %487 = vmatprep.subr.bf16.mxu0 0
      %488 = vmatpush1.bf16.msra.mxu0 0
      %489 = vmatprep.subr.bf16.mxu0 0
      %490 = vmatpush1.bf16.msra.mxu0 0
      %491 = vmatprep.subr.bf16.mxu0 0
      %492 = vmatpush1.bf16.msra.mxu0 0
      %493 = vmatprep.subr.bf16.mxu0 0
      %494 = vmatpush1.bf16.msra.mxu0 0
      %495 = vmatprep.subr.bf16.mxu0 0
      %496 = vmatpush1.bf16.msra.mxu0 0
      %497 = vmatprep.mubr.bf16.mxu0 0
      %498 = vmatmul.mubr.bf16.gmra.mrb[0].mxu0 %v397
      %v499 = vpop.f32.mrb[0].mxu0
      %v500 = vadd.f32 %v328, %v499
      %v501 = vpop.f32.mrb[0].mxu0
      %v502 = vpop.f32.mrb[0].mxu0
      %v503 = vadd.f32 %v333, %v502
      %v504 = vpop.f32.mrb[0].mxu0
      %505 = vmatprep.mubr.bf16.mxu0 0
      %506 = vmatmul.mubr.bf16.gmra.mrb[0].mxu0 %v400
      %v507 = vpop.f32.mrb[0].mxu0
      %v508 = vadd.f32 %v338, %v507
      %v509 = vpop.f32.mrb[0].mxu0
      %v510 = vpop.f32.mrb[0].mxu0
      %v511 = vadd.f32 %v343, %v510
      %v512 = vpop.f32.mrb[0].mxu0
      %513 = vdwg.mxu0
      %v514 = vmax.f32 %v447, 0.0
      %v515 = vmax.f32 %v449, 0.0
      %v516 = vmax.f32 %v500, 0.0
      %v517 = vmax.f32 %v451, 0.0
      %v518 = vmax.f32 %v453, 0.0
      %v519 = vmax.f32 %v503, 0.0
      %v520 = vmax.f32 %v457, 0.0
      %v521 = vmax.f32 %v459, 0.0
      %v522 = vmax.f32 %v508, 0.0
      %v523 = vmax.f32 %v461, 0.0
      %v524 = vmax.f32 %v463, 0.0
      %v525 = vmax.f32 %v511, 0.0
      %v526 = vld [vmem:[%s1] ss:$4 sm:$0x7]
      %vm527 = vcmp.gt.f32.partialorder %v526, 0.5
      %s528 = scalar_lea.vmem %s1, 1
      %v529 = vld [vmem:[%s528] ss:$4 sm:$0x7]
      %vm530 = vcmp.gt.f32.partialorder %v529, 0.5
      %s531 = scalar_lea.vmem %s1, 2
      %v532 = vld [vmem:[%s531] ss:$4 sm:$0x7]
      %vm533 = vcmp.gt.f32.partialorder %v532, 0.5
      %s534 = scalar_lea.vmem %s1, 3
      %v535 = vld [vmem:[%s534] ss:$4 sm:$0x7]
      %vm536 = vcmp.gt.f32.partialorder %v535, 0.5
      %549 = vrot.lane.b32.xlu0 %v514, 127
      %v550 = vpop.permute.xlu0 %549
      %551 = vrot.lane.b32.xlu0 %v515, 127
      %v552 = vpop.permute.xlu0 %551
      %553 = vrot.lane.b32.xlu0 %v516, 127
      %v554 = vpop.permute.xlu0 %553
      %555 = vrot.lane.b32.xlu0 %v517, 127
      %v556 = vpop.permute.xlu0 %555
      %557 = vrot.lane.b32.xlu0 %v518, 127
      %v558 = vpop.permute.xlu0 %557
      %559 = vrot.lane.b32.xlu0 %v519, 127
      %v560 = vpop.permute.xlu0 %559
      %561 = vrot.lane.b32.xlu0 %v520, 127
      %v562 = vpop.permute.xlu0 %561
      %563 = vrot.lane.b32.xlu0 %v521, 127
      %v564 = vpop.permute.xlu0 %563
      %565 = vrot.lane.b32.xlu0 %v522, 127
      %v566 = vpop.permute.xlu0 %565
      %567 = vrot.lane.b32.xlu0 %v523, 127
      %v568 = vpop.permute.xlu0 %567
      %569 = vrot.lane.b32.xlu0 %v524, 127
      %v570 = vpop.permute.xlu0 %569
      %571 = vrot.lane.b32.xlu0 %v525, 127
      %v572 = vpop.permute.xlu0 %571
      %vm573 = vcmask 1039360
      %v574 = vsel %vm573, %v550, %v552
      %v575 = vsel %vm573, %v552, %v554
      %v576 = vsel %vm573, %v556, %v558
      %v577 = vsel %vm573, %v558, %v560
      %v578 = vsel %vm573, %v562, %v564
      %v579 = vsel %vm573, %v564, %v566
      %v580 = vsel %vm573, %v568, %v570
      %v581 = vsel %vm573, %v570, %v572
      %594 = vrot.lane.b32.xlu0 %v514, 67
      %v595 = vpop.permute.xlu0 %594
      %596 = vrot.lane.b32.xlu0 %v517, 67
      %v597 = vpop.permute.xlu0 %596
      %598 = vrot.lane.b32.xlu0 %v520, 67
      %v599 = vpop.permute.xlu0 %598
      %600 = vrot.lane.b32.xlu0 %v523, 67
      %v601 = vpop.permute.xlu0 %600
      %vm606 = vcmask 547840
      %v607 = vsel %vm606, %v554, %v595
      %v608 = vsel %vm606, %v560, %v597
      %v609 = vsel %vm606, %v566, %v599
      %v610 = vsel %vm606, %v572, %v601
      %v611 = vsel %vm527, 1, 0
      %v612 = vlaneseq
      %v613 = vshrl.u32 %v612, 7
      %v614 = vsub.s32 0, %v613
      %v615 = vrot.slane %v611, %v614
      %v616 = vlaneseq
      %v617 = vshrl.u32 %v616, 7
      %v618 = vsub.s32 1, %v617
      %v619 = vrot.slane %v611, %v618
      %v620 = vlaneseq
      %v621 = vshrl.u32 %v620, 7
      %v622 = vsub.s32 2, %v621
      %v623 = vrot.slane %v611, %v622
      %vm624 = vcmp.eq.s32.totalorder %v615, 1
      %vm625 = vcmp.eq.s32.totalorder %v619, 1
      %vm626 = vcmp.eq.s32.totalorder %v623, 1
      %v627 = vsel %vm624, %v574, %v514
      %v628 = vsel %vm625, %v575, %v515
      %v629 = vsel %vm626, %v607, %v516
      %v630 = vsel %vm624, %v576, %v517
      %v631 = vsel %vm625, %v577, %v518
      %v632 = vsel %vm626, %v608, %v519
      %v633 = vsel %vm624, %v578, %v520
      %v634 = vsel %vm625, %v579, %v521
      %v635 = vsel %vm626, %v609, %v522
      %v636 = vsel %vm624, %v580, %v523
      %v637 = vsel %vm625, %v581, %v524
      %v638 = vsel %vm626, %v610, %v525
      %643 = vrot.lane.b32.xlu0 %v629, 61
      %v644 = vpop.permute.xlu0 %643
      %645 = vrot.lane.b32.xlu0 %v632, 61
      %v646 = vpop.permute.xlu0 %645
      %647 = vrot.lane.b32.xlu0 %v635, 61
      %v648 = vpop.permute.xlu0 %647
      %649 = vrot.lane.b32.xlu0 %v638, 61
      %v650 = vpop.permute.xlu0 %649
      %663 = vrot.lane.b32.xlu0 %v627, 1
      %v664 = vpop.permute.xlu0 %663
      %665 = vrot.lane.b32.xlu0 %v628, 1
      %v666 = vpop.permute.xlu0 %665
      %667 = vrot.lane.b32.xlu0 %v629, 1
      %v668 = vpop.permute.xlu0 %667
      %669 = vrot.lane.b32.xlu0 %v630, 1
      %v670 = vpop.permute.xlu0 %669
      %671 = vrot.lane.b32.xlu0 %v631, 1
      %v672 = vpop.permute.xlu0 %671
      %673 = vrot.lane.b32.xlu0 %v632, 1
      %v674 = vpop.permute.xlu0 %673
      %675 = vrot.lane.b32.xlu0 %v633, 1
      %v676 = vpop.permute.xlu0 %675
      %677 = vrot.lane.b32.xlu0 %v634, 1
      %v678 = vpop.permute.xlu0 %677
      %679 = vrot.lane.b32.xlu0 %v635, 1
      %v680 = vpop.permute.xlu0 %679
      %681 = vrot.lane.b32.xlu0 %v636, 1
      %v682 = vpop.permute.xlu0 %681
      %683 = vrot.lane.b32.xlu0 %v637, 1
      %v684 = vpop.permute.xlu0 %683
      %685 = vrot.lane.b32.xlu0 %v638, 1
      %v686 = vpop.permute.xlu0 %685
      %vm687 = vcmask 7168
      %v688 = vsel %vm687, %v664, %v666
      %v689 = vsel %vm687, %v666, %v668
      %v690 = vsel %vm687, %v670, %v672
      %v691 = vsel %vm687, %v672, %v674
      %v692 = vsel %vm687, %v676, %v678
      %v693 = vsel %vm687, %v678, %v680
      %v694 = vsel %vm687, %v682, %v684
      %v695 = vsel %vm687, %v684, %v686
      %v708 = vsel %vm687, %v644, %v664
      %v709 = vsel %vm687, %v646, %v670
      %v710 = vsel %vm687, %v648, %v676
      %v711 = vsel %vm687, %v650, %v682
      %v712 = vsel %vm530, 1, 0
      %v713 = vlaneseq
      %v714 = vshrl.u32 %v713, 7
      %v715 = vsub.s32 0, %v714
      %v716 = vrot.slane %v712, %v715
      %v717 = vlaneseq
      %v718 = vshrl.u32 %v717, 7
      %v719 = vsub.s32 1, %v718
      %v720 = vrot.slane %v712, %v719
      %v721 = vlaneseq
      %v722 = vshrl.u32 %v721, 7
      %v723 = vsub.s32 2, %v722
      %v724 = vrot.slane %v712, %v723
      %vm725 = vcmp.eq.s32.totalorder %v716, 1
      %vm726 = vcmp.eq.s32.totalorder %v720, 1
      %vm727 = vcmp.eq.s32.totalorder %v724, 1
      %v728 = vsel %vm725, %v708, %v627
      %v729 = vsel %vm726, %v688, %v628
      %v730 = vsel %vm727, %v689, %v629
      %v731 = vsel %vm725, %v709, %v630
      %v732 = vsel %vm726, %v690, %v631
      %v733 = vsel %vm727, %v691, %v632
      %v734 = vsel %vm725, %v710, %v633
      %v735 = vsel %vm726, %v692, %v634
      %v736 = vsel %vm727, %v693, %v635
      %v737 = vsel %vm725, %v711, %v636
      %v738 = vsel %vm726, %v694, %v637
      %v739 = vsel %vm727, %v695, %v638
      %752 = vrot.lane.b32.xlu0 %v728, 110
      %v753 = vpop.permute.xlu0 %752
      %754 = vrot.lane.b32.xlu0 %v729, 110
      %v755 = vpop.permute.xlu0 %754
      %756 = vrot.lane.b32.xlu0 %v730, 110
      %v757 = vpop.permute.xlu0 %756
      %758 = vrot.lane.b32.xlu0 %v731, 110
      %v759 = vpop.permute.xlu0 %758
      %760 = vrot.lane.b32.xlu0 %v732, 110
      %v761 = vpop.permute.xlu0 %760
      %762 = vrot.lane.b32.xlu0 %v733, 110
      %v763 = vpop.permute.xlu0 %762
      %764 = vrot.lane.b32.xlu0 %v734, 110
      %v765 = vpop.permute.xlu0 %764
      %766 = vrot.lane.b32.xlu0 %v735, 110
      %v767 = vpop.permute.xlu0 %766
      %768 = vrot.lane.b32.xlu0 %v736, 110
      %v769 = vpop.permute.xlu0 %768
      %770 = vrot.lane.b32.xlu0 %v737, 110
      %v771 = vpop.permute.xlu0 %770
      %772 = vrot.lane.b32.xlu0 %v738, 110
      %v773 = vpop.permute.xlu0 %772
      %774 = vrot.lane.b32.xlu0 %v739, 110
      %v775 = vpop.permute.xlu0 %774
      %vm776 = vcmask 900096
      %v777 = vsel %vm776, %v753, %v755
      %v778 = vsel %vm776, %v755, %v757
      %v779 = vsel %vm776, %v759, %v761
      %v780 = vsel %vm776, %v761, %v763
      %v781 = vsel %vm776, %v765, %v767
      %v782 = vsel %vm776, %v767, %v769
      %v783 = vsel %vm776, %v771, %v773
      %v784 = vsel %vm776, %v773, %v775
      %797 = vrot.lane.b32.xlu0 %v728, 50
      %v798 = vpop.permute.xlu0 %797
      %799 = vrot.lane.b32.xlu0 %v731, 50
      %v800 = vpop.permute.xlu0 %799
      %801 = vrot.lane.b32.xlu0 %v734, 50
      %v802 = vpop.permute.xlu0 %801
      %803 = vrot.lane.b32.xlu0 %v737, 50
      %v804 = vpop.permute.xlu0 %803
      %vm809 = vcmask 408576
      %v810 = vsel %vm809, %v757, %v798
      %v811 = vsel %vm809, %v763, %v800
      %v812 = vsel %vm809, %v769, %v802
      %v813 = vsel %vm809, %v775, %v804
      %v814 = vsel %vm533, 1, 0
      %v815 = vlaneseq
      %v816 = vshrl.u32 %v815, 7
      %v817 = vsub.s32 0, %v816
      %v818 = vrot.slane %v814, %v817
      %v819 = vlaneseq
      %v820 = vshrl.u32 %v819, 7
      %v821 = vsub.s32 1, %v820
      %v822 = vrot.slane %v814, %v821
      %v823 = vlaneseq
      %v824 = vshrl.u32 %v823, 7
      %v825 = vsub.s32 2, %v824
      %v826 = vrot.slane %v814, %v825
      %vm827 = vcmp.eq.s32.totalorder %v818, 1
      %vm828 = vcmp.eq.s32.totalorder %v822, 1
      %vm829 = vcmp.eq.s32.totalorder %v826, 1
      %v830 = vsel %vm827, %v777, %v728
      %v831 = vsel %vm828, %v778, %v729
      %v832 = vsel %vm829, %v810, %v730
      %v833 = vsel %vm827, %v779, %v731
      %v834 = vsel %vm828, %v780, %v732
      %v835 = vsel %vm829, %v811, %v733
      %v836 = vsel %vm827, %v781, %v734
      %v837 = vsel %vm828, %v782, %v735
      %v838 = vsel %vm829, %v812, %v736
      %v839 = vsel %vm827, %v783, %v737
      %v840 = vsel %vm828, %v784, %v738
      %v841 = vsel %vm829, %v813, %v739
      %846 = vrot.lane.b32.xlu0 %v832, 78
      %v847 = vpop.permute.xlu0 %846
      %848 = vrot.lane.b32.xlu0 %v835, 78
      %v849 = vpop.permute.xlu0 %848
      %850 = vrot.lane.b32.xlu0 %v838, 78
      %v851 = vpop.permute.xlu0 %850
      %852 = vrot.lane.b32.xlu0 %v841, 78
      %v853 = vpop.permute.xlu0 %852
      %866 = vrot.lane.b32.xlu0 %v830, 18
      %v867 = vpop.permute.xlu0 %866
      %868 = vrot.lane.b32.xlu0 %v831, 18
      %v869 = vpop.permute.xlu0 %868
      %870 = vrot.lane.b32.xlu0 %v832, 18
      %v871 = vpop.permute.xlu0 %870
      %872 = vrot.lane.b32.xlu0 %v833, 18
      %v873 = vpop.permute.xlu0 %872
      %874 = vrot.lane.b32.xlu0 %v834, 18
      %v875 = vpop.permute.xlu0 %874
      %876 = vrot.lane.b32.xlu0 %v835, 18
      %v877 = vpop.permute.xlu0 %876
      %878 = vrot.lane.b32.xlu0 %v836, 18
      %v879 = vpop.permute.xlu0 %878
      %880 = vrot.lane.b32.xlu0 %v837, 18
      %v881 = vpop.permute.xlu0 %880
      %882 = vrot.lane.b32.xlu0 %v838, 18
      %v883 = vpop.permute.xlu0 %882
      %884 = vrot.lane.b32.xlu0 %v839, 18
      %v885 = vpop.permute.xlu0 %884
      %886 = vrot.lane.b32.xlu0 %v840, 18
      %v887 = vpop.permute.xlu0 %886
      %888 = vrot.lane.b32.xlu0 %v841, 18
      %v889 = vpop.permute.xlu0 %888
      %vm890 = vcmask 146432
      %v891 = vsel %vm890, %v867, %v869
      %v892 = vsel %vm890, %v869, %v871
      %v893 = vsel %vm890, %v873, %v875
      %v894 = vsel %vm890, %v875, %v877
      %v895 = vsel %vm890, %v879, %v881
      %v896 = vsel %vm890, %v881, %v883
      %v897 = vsel %vm890, %v885, %v887
      %v898 = vsel %vm890, %v887, %v889
      %v911 = vsel %vm890, %v847, %v867
      %v912 = vsel %vm890, %v849, %v873
      %v913 = vsel %vm890, %v851, %v879
      %v914 = vsel %vm890, %v853, %v885
      %v915 = vsel %vm536, 1, 0
      %v916 = vlaneseq
      %v917 = vshrl.u32 %v916, 7
      %v918 = vsub.s32 0, %v917
      %v919 = vrot.slane %v915, %v918
      %v920 = vlaneseq
      %v921 = vshrl.u32 %v920, 7
      %v922 = vsub.s32 1, %v921
      %v923 = vrot.slane %v915, %v922
      %v924 = vlaneseq
      %v925 = vshrl.u32 %v924, 7
      %v926 = vsub.s32 2, %v925
      %v927 = vrot.slane %v915, %v926
      %vm928 = vcmp.eq.s32.totalorder %v919, 1
      %vm929 = vcmp.eq.s32.totalorder %v923, 1
      %vm930 = vcmp.eq.s32.totalorder %v927, 1
      %v931 = vsel %vm928, %v911, %v830
      %v932 = vsel %vm929, %v891, %v831
      %v933 = vsel %vm930, %v892, %v832
      %v934 = vsel %vm928, %v912, %v833
      %v935 = vsel %vm929, %v893, %v834
      %v936 = vsel %vm930, %v894, %v835
      %v937 = vsel %vm928, %v913, %v836
      %v938 = vsel %vm929, %v895, %v837
      %v939 = vsel %vm930, %v896, %v838
      %v940 = vsel %vm928, %v914, %v839
      %v941 = vsel %vm929, %v897, %v840
      %v942 = vsel %vm930, %v898, %v841
      %v943 = vpack.c.bf16 %v934, %v931
      %v944 = vpack.c.bf16 %v935, %v932
      %v945 = vpack.c.bf16 %v936, %v933
      %v946 = vpack.c.bf16 %v940, %v937
      %v947 = vpack.c.bf16 %v941, %v938
      %v948 = vpack.c.bf16 %v942, %v939
      %951 = vrot.lane.b32.xlu0 %v945, 79
      %v952 = vpop.permute.xlu0 %951
      %953 = vrot.lane.b32.xlu0 %v948, 79
      %v954 = vpop.permute.xlu0 %953
      %959 = vrot.lane.b32.xlu0 %v943, 19
      %v960 = vpop.permute.xlu0 %959
      %961 = vrot.lane.b32.xlu0 %v944, 19
      %v962 = vpop.permute.xlu0 %961
      %963 = vrot.lane.b32.xlu0 %v945, 19
      %v964 = vpop.permute.xlu0 %963
      %965 = vrot.lane.b32.xlu0 %v946, 19
      %v966 = vpop.permute.xlu0 %965
      %967 = vrot.lane.b32.xlu0 %v947, 19
      %v968 = vpop.permute.xlu0 %967
      %969 = vrot.lane.b32.xlu0 %v948, 19
      %v970 = vpop.permute.xlu0 %969
      %vm971 = vcmask 154624
      %v972 = vsel %vm971, %v960, %v962
      %v973 = vsel %vm971, %v962, %v964
      %v974 = vsel %vm971, %v966, %v968
      %v975 = vsel %vm971, %v968, %v970
      %vm980 = vcmask 154624
      %v983 = vsel %vm980, %v952, %v960
      %v987 = vsel %vm980, %v954, %v966
      %989 = vst [vmem:[#allocation2] sm:$0xff] %v983
      %990 = vst [vmem:[#allocation2 + $0x8] sm:$0xff] %v972
      %vm991 = vcmask 556032
      %992 = vst.msk [vmem:[#allocation2 + $0x10] sm:$0xff] %vm991, %v973
      %993 = vst [vmem:[#allocation2 + $0x18] sm:$0xff] %v987
      %994 = vst [vmem:[#allocation2 + $0x20] sm:$0xff] %v974
      %995 = vst.msk [vmem:[#allocation2 + $0x28] sm:$0xff] %vm991, %v975
      %996 = vrot.lane.b32.xlu0 %v945, 78
      %v997 = vpop.permute.xlu0 %996
      %998 = vrot.lane.b32.xlu0 %v948, 78
      %v999 = vpop.permute.xlu0 %998
      %1000 = vrot.lane.b32.xlu0 %v943, 18
      %v1001 = vpop.permute.xlu0 %1000
      %1002 = vrot.lane.b32.xlu0 %v944, 18
      %v1003 = vpop.permute.xlu0 %1002
      %1004 = vrot.lane.b32.xlu0 %v945, 18
      %v1005 = vpop.permute.xlu0 %1004
      %1006 = vrot.lane.b32.xlu0 %v946, 18
      %v1007 = vpop.permute.xlu0 %1006
      %1008 = vrot.lane.b32.xlu0 %v947, 18
      %v1009 = vpop.permute.xlu0 %1008
      %1010 = vrot.lane.b32.xlu0 %v948, 18
      %v1011 = vpop.permute.xlu0 %1010
      %vm1012 = vcmask 146432
      %v1013 = vsel %vm1012, %v1001, %v1003
      %v1014 = vsel %vm1012, %v1003, %v1005
      %v1015 = vsel %vm1012, %v1007, %v1009
      %v1016 = vsel %vm1012, %v1009, %v1011
      %v1023 = vsel %vm890, %v997, %v1001
      %v1027 = vsel %vm890, %v999, %v1007
      %1029 = vst [vmem:[#allocation2 + $0x30] sm:$0xff] %v1023
      %1030 = vst [vmem:[#allocation2 + $0x38] sm:$0xff] %v1013
      %1031 = vst.msk [vmem:[#allocation2 + $0x40] sm:$0xff] %vm991, %v1014
      %1032 = vst [vmem:[#allocation2 + $0x48] sm:$0xff] %v1027
      %1033 = vst [vmem:[#allocation2 + $0x50] sm:$0xff] %v1015
      %1034 = vst.msk [vmem:[#allocation2 + $0x58] sm:$0xff] %vm991, %v1016
      %1035 = vrot.lane.b32.xlu0 %v945, 77
      %v1036 = vpop.permute.xlu0 %1035
      %1037 = vrot.lane.b32.xlu0 %v948, 77
      %v1038 = vpop.permute.xlu0 %1037
      %1039 = vrot.lane.b32.xlu0 %v943, 17
      %v1040 = vpop.permute.xlu0 %1039
      %1041 = vrot.lane.b32.xlu0 %v944, 17
      %v1042 = vpop.permute.xlu0 %1041
      %1043 = vrot.lane.b32.xlu0 %v945, 17
      %v1044 = vpop.permute.xlu0 %1043
      %1045 = vrot.lane.b32.xlu0 %v946, 17
      %v1046 = vpop.permute.xlu0 %1045
      %1047 = vrot.lane.b32.xlu0 %v947, 17
      %v1048 = vpop.permute.xlu0 %1047
      %1049 = vrot.lane.b32.xlu0 %v948, 17
      %v1050 = vpop.permute.xlu0 %1049
      %vm1051 = vcmask 138240
      %v1052 = vsel %vm1051, %v1040, %v1042
      %v1053 = vsel %vm1051, %v1042, %v1044
      %v1054 = vsel %vm1051, %v1046, %v1048
      %v1055 = vsel %vm1051, %v1048, %v1050
      %vm1060 = vcmask 138240
      %v1063 = vsel %vm1060, %v1036, %v1040
      %v1067 = vsel %vm1060, %v1038, %v1046
      %1069 = vst [vmem:[#allocation2 + $0x60] sm:$0xff] %v1063
      %1070 = vst [vmem:[#allocation2 + $0x68] sm:$0xff] %v1052
      %1071 = vst.msk [vmem:[#allocation2 + $0x70] sm:$0xff] %vm991, %v1053
      %1072 = vst [vmem:[#allocation2 + $0x78] sm:$0xff] %v1067
      %1073 = vst [vmem:[#allocation2 + $0x80] sm:$0xff] %v1054
      %1074 = vst.msk [vmem:[#allocation2 + $0x88] sm:$0xff] %vm991, %v1055
      %1075 = vrot.lane.b32.xlu0 %v945, 61
      %v1076 = vpop.permute.xlu0 %1075
      %1077 = vrot.lane.b32.xlu0 %v948, 61
      %v1078 = vpop.permute.xlu0 %1077
      %1079 = vrot.lane.b32.xlu0 %v943, 1
      %v1080 = vpop.permute.xlu0 %1079
      %1081 = vrot.lane.b32.xlu0 %v944, 1
      %v1082 = vpop.permute.xlu0 %1081
      %1083 = vrot.lane.b32.xlu0 %v945, 1
      %v1084 = vpop.permute.xlu0 %1083
      %1085 = vrot.lane.b32.xlu0 %v946, 1
      %v1086 = vpop.permute.xlu0 %1085
      %1087 = vrot.lane.b32.xlu0 %v947, 1
      %v1088 = vpop.permute.xlu0 %1087
      %1089 = vrot.lane.b32.xlu0 %v948, 1
      %v1090 = vpop.permute.xlu0 %1089
      %vm1091 = vcmask 7168
      %v1092 = vsel %vm1091, %v1080, %v1082
      %v1093 = vsel %vm1091, %v1082, %v1084
      %v1094 = vsel %vm1091, %v1086, %v1088
      %v1095 = vsel %vm1091, %v1088, %v1090
      %v1102 = vsel %vm687, %v1076, %v1080
      %v1106 = vsel %vm687, %v1078, %v1086
      %1108 = vst [vmem:[#allocation2 + $0x90] sm:$0xff] %v1102
      %1109 = vst [vmem:[#allocation2 + $0x98] sm:$0xff] %v1092
      %1110 = vst.msk [vmem:[#allocation2 + $0xa0] sm:$0xff] %vm991, %v1093
      %1111 = vst [vmem:[#allocation2 + $0xa8] sm:$0xff] %v1106
      %1112 = vst [vmem:[#allocation2 + $0xb0] sm:$0xff] %v1094
      %1113 = vst.msk [vmem:[#allocation2 + $0xb8] sm:$0xff] %vm991, %v1095
      %1114 = vst [vmem:[#allocation2 + $0xc0] sm:$0xff] %v943
      %1115 = vst [vmem:[#allocation2 + $0xc8] sm:$0xff] %v944
      %1116 = vst.msk [vmem:[#allocation2 + $0xd0] sm:$0xff] %vm991, %v945
      %1117 = vst [vmem:[#allocation2 + $0xd8] sm:$0xff] %v946
      %1118 = vst [vmem:[#allocation2 + $0xe0] sm:$0xff] %v947
      %1119 = vst.msk [vmem:[#allocation2 + $0xe8] sm:$0xff] %vm991, %v948
      %1120 = vrot.lane.b32.xlu0 %v943, 127
      %v1121 = vpop.permute.xlu0 %1120
      %1122 = vrot.lane.b32.xlu0 %v944, 127
      %v1123 = vpop.permute.xlu0 %1122
      %1124 = vrot.lane.b32.xlu0 %v945, 127
      %v1125 = vpop.permute.xlu0 %1124
      %1126 = vrot.lane.b32.xlu0 %v946, 127
      %v1127 = vpop.permute.xlu0 %1126
      %1128 = vrot.lane.b32.xlu0 %v947, 127
      %v1129 = vpop.permute.xlu0 %1128
      %1130 = vrot.lane.b32.xlu0 %v948, 127
      %v1131 = vpop.permute.xlu0 %1130
      %vm1132 = vcmask 1039360
      %v1133 = vsel %vm1132, %v1121, %v1123
      %v1134 = vsel %vm1132, %v1123, %v1125
      %v1135 = vsel %vm1132, %v1127, %v1129
      %v1136 = vsel %vm1132, %v1129, %v1131
      %1141 = vrot.lane.b32.xlu0 %v943, 67
      %v1142 = vpop.permute.xlu0 %1141
      %1143 = vrot.lane.b32.xlu0 %v946, 67
      %v1144 = vpop.permute.xlu0 %1143
      %v1147 = vsel %vm606, %v1125, %v1142
      %v1151 = vsel %vm606, %v1131, %v1144
      %1153 = vst [vmem:[#allocation2 + $0xf0] sm:$0xff] %v1133
      %1154 = vst [vmem:[#allocation2 + $0xf8] sm:$0xff] %v1134
      %1155 = vst.msk [vmem:[#allocation2 + $0x100] sm:$0xff] %vm991, %v1147
      %1156 = vst [vmem:[#allocation2 + $0x108] sm:$0xff] %v1135
      %1157 = vst [vmem:[#allocation2 + $0x110] sm:$0xff] %v1136
      %1158 = vst.msk [vmem:[#allocation2 + $0x118] sm:$0xff] %vm991, %v1151
      %1159 = vrot.lane.b32.xlu0 %v943, 111
      %v1160 = vpop.permute.xlu0 %1159
      %1161 = vrot.lane.b32.xlu0 %v944, 111
      %v1162 = vpop.permute.xlu0 %1161
      %1163 = vrot.lane.b32.xlu0 %v945, 111
      %v1164 = vpop.permute.xlu0 %1163
      %1165 = vrot.lane.b32.xlu0 %v946, 111
      %v1166 = vpop.permute.xlu0 %1165
      %1167 = vrot.lane.b32.xlu0 %v947, 111
      %v1168 = vpop.permute.xlu0 %1167
      %1169 = vrot.lane.b32.xlu0 %v948, 111
      %v1170 = vpop.permute.xlu0 %1169
      %vm1171 = vcmask 908288
      %v1172 = vsel %vm1171, %v1160, %v1162
      %v1173 = vsel %vm1171, %v1162, %v1164
      %v1174 = vsel %vm1171, %v1166, %v1168
      %v1175 = vsel %vm1171, %v1168, %v1170
      %1180 = vrot.lane.b32.xlu0 %v943, 51
      %v1181 = vpop.permute.xlu0 %1180
      %1182 = vrot.lane.b32.xlu0 %v946, 51
      %v1183 = vpop.permute.xlu0 %1182
      %vm1184 = vcmask 416768
      %v1187 = vsel %vm1184, %v1164, %v1181
      %v1191 = vsel %vm1184, %v1170, %v1183
      %1193 = vst [vmem:[#allocation2 + $0x120] sm:$0xff] %v1172
      %1194 = vst [vmem:[#allocation2 + $0x128] sm:$0xff] %v1173
      %1195 = vst.msk [vmem:[#allocation2 + $0x130] sm:$0xff] %vm991, %v1187
      %1196 = vst [vmem:[#allocation2 + $0x138] sm:$0xff] %v1174
      %1197 = vst [vmem:[#allocation2 + $0x140] sm:$0xff] %v1175
      %1198 = vst.msk [vmem:[#allocation2 + $0x148] sm:$0xff] %vm991, %v1191
      %1199 = vrot.lane.b32.xlu0 %v943, 110
      %v1200 = vpop.permute.xlu0 %1199
      %1201 = vrot.lane.b32.xlu0 %v944, 110
      %v1202 = vpop.permute.xlu0 %1201
      %1203 = vrot.lane.b32.xlu0 %v945, 110
      %v1204 = vpop.permute.xlu0 %1203
      %1205 = vrot.lane.b32.xlu0 %v946, 110
      %v1206 = vpop.permute.xlu0 %1205
      %1207 = vrot.lane.b32.xlu0 %v947, 110
      %v1208 = vpop.permute.xlu0 %1207
      %1209 = vrot.lane.b32.xlu0 %v948, 110
      %v1210 = vpop.permute.xlu0 %1209
      %vm1211 = vcmask 900096
      %v1212 = vsel %vm1211, %v1200, %v1202
      %v1213 = vsel %vm1211, %v1202, %v1204
      %v1214 = vsel %vm1211, %v1206, %v1208
      %v1215 = vsel %vm1211, %v1208, %v1210
      %1220 = vrot.lane.b32.xlu0 %v943, 50
      %v1221 = vpop.permute.xlu0 %1220
      %1222 = vrot.lane.b32.xlu0 %v946, 50
      %v1223 = vpop.permute.xlu0 %1222
      %v1226 = vsel %vm809, %v1204, %v1221
      %v1230 = vsel %vm809, %v1210, %v1223
      %1232 = vst [vmem:[#allocation2 + $0x150] sm:$0xff] %v1212
      %1233 = vst [vmem:[#allocation2 + $0x158] sm:$0xff] %v1213
      %1234 = vst.msk [vmem:[#allocation2 + $0x160] sm:$0xff] %vm991, %v1226
      %1235 = vst [vmem:[#allocation2 + $0x168] sm:$0xff] %v1214
      %1236 = vst [vmem:[#allocation2 + $0x170] sm:$0xff] %v1215
      %1237 = vst.msk [vmem:[#allocation2 + $0x178] sm:$0xff] %vm991, %v1230
      %1238 = vrot.lane.b32.xlu0 %v943, 109
      %v1239 = vpop.permute.xlu0 %1238
      %1240 = vrot.lane.b32.xlu0 %v944, 109
      %v1241 = vpop.permute.xlu0 %1240
      %1242 = vrot.lane.b32.xlu0 %v945, 109
      %v1243 = vpop.permute.xlu0 %1242
      %1244 = vrot.lane.b32.xlu0 %v946, 109
      %v1245 = vpop.permute.xlu0 %1244
      %1246 = vrot.lane.b32.xlu0 %v947, 109
      %v1247 = vpop.permute.xlu0 %1246
      %1248 = vrot.lane.b32.xlu0 %v948, 109
      %v1249 = vpop.permute.xlu0 %1248
      %vm1250 = vcmask 891904
      %v1251 = vsel %vm1250, %v1239, %v1241
      %v1252 = vsel %vm1250, %v1241, %v1243
      %v1253 = vsel %vm1250, %v1245, %v1247
      %v1254 = vsel %vm1250, %v1247, %v1249
      %1259 = vrot.lane.b32.xlu0 %v943, 49
      %v1260 = vpop.permute.xlu0 %1259
      %1261 = vrot.lane.b32.xlu0 %v946, 49
      %v1262 = vpop.permute.xlu0 %1261
      %vm1263 = vcmask 400384
      %v1266 = vsel %vm1263, %v1243, %v1260
      %v1270 = vsel %vm1263, %v1249, %v1262
      %1272 = vst [vmem:[#allocation2 + $0x180] sm:$0xff] %v1251
      %1273 = vst [vmem:[#allocation2 + $0x188] sm:$0xff] %v1252
      %1274 = vst.msk [vmem:[#allocation2 + $0x190] sm:$0xff] %vm991, %v1266
      %1275 = vst [vmem:[#allocation2 + $0x198] sm:$0xff] %v1253
      %1276 = vst [vmem:[#allocation2 + $0x1a0] sm:$0xff] %v1254
      %1277 = vst.msk [vmem:[#allocation2 + $0x1a8] sm:$0xff] %vm991, %v1270
      %v1278 = vld [vmem:[%s4] sm:$0xff]
      %v1279 = vld [vmem:[%s4 + $0x8] sm:$0xf]
      %v1280 = vld [vmem:[%s4 + $0xc] sm:$0xff]
      %v1281 = vld [vmem:[%s4 + $0x14] sm:$0xf]
      %v1282 = vld [vmem:[%s4 + $0x18] sm:$0x33]
      %v1283 = vld [vmem:[%s4 + $0x20] sm:$0x3]
      %v1284 = vld [vmem:[#allocation2] sm:$0xff]
      %v1285 = vld [vmem:[#allocation2 + $0x8] sm:$0xff]
      %v1286 = vld [vmem:[#allocation2 + $0x10] sm:$0xff]
      %v1287 = vld [vmem:[#allocation2 + $0x18] sm:$0xff]
      %v1288 = vld [vmem:[#allocation2 + $0x20] sm:$0xff]
      %v1289 = vld [vmem:[#allocation2 + $0x28] sm:$0xff]
      %v1290 = vld [vmem:[#allocation2 + $0x30] sm:$0xff]
      %v1291 = vld [vmem:[#allocation2 + $0x38] sm:$0xff]
      %v1292 = vld [vmem:[#allocation2 + $0x40] sm:$0xff]
      %v1293 = vld [vmem:[#allocation2 + $0x48] sm:$0xff]
      %v1294 = vld [vmem:[#allocation2 + $0x50] sm:$0xff]
      %v1295 = vld [vmem:[#allocation2 + $0x58] sm:$0xff]
      %v1296 = vld [vmem:[#allocation2 + $0x60] sm:$0xff]
      %v1297 = vld [vmem:[#allocation2 + $0x68] sm:$0xff]
      %v1298 = vld [vmem:[#allocation2 + $0x70] sm:$0xff]
      %v1299 = vld [vmem:[#allocation2 + $0x78] sm:$0xff]
      %v1300 = vld [vmem:[#allocation2 + $0x80] sm:$0xff]
      %v1301 = vld [vmem:[#allocation2 + $0x88] sm:$0xff]
      %v1302 = vld [vmem:[#allocation2 + $0x90] sm:$0xff]
      %v1303 = vld [vmem:[#allocation2 + $0x98] sm:$0xff]
      %v1304 = vld [vmem:[#allocation2 + $0xa0] sm:$0xff]
      %v1305 = vld [vmem:[#allocation2 + $0xa8] sm:$0xff]
      %v1306 = vld [vmem:[#allocation2 + $0xb0] sm:$0xff]
      %v1307 = vld [vmem:[#allocation2 + $0xb8] sm:$0xff]
      %v1308 = vld [vmem:[#allocation2 + $0xc0] sm:$0xff]
      %v1309 = vld [vmem:[#allocation2 + $0xc8] sm:$0xff]
      %v1310 = vld [vmem:[#allocation2 + $0xd0] sm:$0xff]
      %v1311 = vld [vmem:[#allocation2 + $0xd8] sm:$0xff]
      %v1312 = vld [vmem:[#allocation2 + $0xe0] sm:$0xff]
      %v1313 = vld [vmem:[#allocation2 + $0xe8] sm:$0xff]
      %v1314 = vld [vmem:[#allocation2 + $0xf0] sm:$0xff]
      %v1315 = vld [vmem:[#allocation2 + $0xf8] sm:$0xff]
      %v1316 = vld [vmem:[#allocation2 + $0x100] sm:$0xff]
      %v1317 = vld [vmem:[#allocation2 + $0x108] sm:$0xff]
      %v1318 = vld [vmem:[#allocation2 + $0x110] sm:$0xff]
      %v1319 = vld [vmem:[#allocation2 + $0x118] sm:$0xff]
      %v1320 = vld [vmem:[#allocation2 + $0x120] sm:$0xff]
      %v1321 = vld [vmem:[#allocation2 + $0x128] sm:$0xff]
      %v1322 = vld [vmem:[#allocation2 + $0x130] sm:$0xff]
      %v1323 = vld [vmem:[#allocation2 + $0x138] sm:$0xff]
      %v1324 = vld [vmem:[#allocation2 + $0x140] sm:$0xff]
      %v1325 = vld [vmem:[#allocation2 + $0x148] sm:$0xff]
      %v1326 = vld [vmem:[#allocation2 + $0x150] sm:$0xff]
      %v1327 = vld [vmem:[#allocation2 + $0x158] sm:$0xff]
      %v1328 = vld [vmem:[#allocation2 + $0x160] sm:$0xff]
      %v1329 = vld [vmem:[#allocation2 + $0x168] sm:$0xff]
      %v1330 = vld [vmem:[#allocation2 + $0x170] sm:$0xff]
      %v1331 = vld [vmem:[#allocation2 + $0x178] sm:$0xff]
      %v1332 = vld [vmem:[#allocation2 + $0x180] sm:$0xff]
      %v1333 = vld [vmem:[#allocation2 + $0x188] sm:$0xff]
      %v1334 = vld [vmem:[#allocation2 + $0x190] sm:$0xff]
      %v1335 = vld [vmem:[#allocation2 + $0x198] sm:$0xff]
      %v1336 = vld [vmem:[#allocation2 + $0x1a0] sm:$0xff]
      %v1337 = vld [vmem:[#allocation2 + $0x1a8] sm:$0xff]
      %v1338 = vld [vmem:[%s5] sm:$0xff]
      %v1339 = vld [vmem:[%s5 + $0x8] sm:$0xff]
      %v1340 = vld [vmem:[%s5 + $0x10] sm:$0xf]
      %1342 = vset.pattern.permute.xlu0 0
      %1343 = vperm.xlu0 %1342, %v1338
      %v1344 = vpop.permute.xlu0 %1343
      %1347 = vset.pattern.permute.xlu0 0
      %1348 = vperm.xlu0 %1347, %v1339
      %v1349 = vpop.permute.xlu0 %1348
      %1352 = vset.pattern.permute.xlu0 0
      %1353 = vperm.xlu0 %1352, %v1340
      %v1354 = vpop.permute.xlu0 %1353
      %v1362 = vunpack.c.l.b16 %v1278
      %v1363 = vunpack.c.h.b16 %v1278
      %v1364 = vunpack.c.l.b16 %v1279
      %v1365 = vunpack.c.l.b16 %v1280
      %v1366 = vunpack.c.h.b16 %v1280
      %v1367 = vunpack.c.l.b16 %v1281
      %v1368 = vunpack.c.l.b16 %v1282
      %v1369 = vunpack.c.h.b16 %v1282
      %v1370 = vunpack.c.l.b16 %v1283
      %v1371 = vpack.c.b16 %v1365, %v1362
      %v1372 = vpack.c.b16 %v1366, %v1363
      %v1373 = vpack.c.b16 %v1367, %v1364
      %v1374 = vpack.c.b16 %v1368, %v1368
      %v1375 = vpack.c.b16 %v1369, %v1369
      %v1376 = vpack.c.b16 %v1370, %v1370
      %vm1381 = vcmask 261120
      %v1383 = vsel %vm1381, %v1373, 0
      %v1386 = vsel %vm1381, %v1376, 0
      %1388 = vmatprep.subr.bf16.mxu0 %v1285
      %1389 = vmatpush1.bf16.msra.mxu0 %v1284
      %1390 = vmatprep.subr.bf16.mxu0 %v1288
      %1391 = vmatpush1.bf16.msra.mxu0 %v1287
      %1392 = vmatprep.subr.bf16.mxu0 %v1291
      %1393 = vmatpush1.bf16.msra.mxu0 %v1290
      %1394 = vmatprep.subr.bf16.mxu0 %v1294
      %1395 = vmatpush1.bf16.msra.mxu0 %v1293
      %1396 = vmatprep.subr.bf16.mxu0 %v1297
      %1397 = vmatpush1.bf16.msra.mxu0 %v1296
      %1398 = vmatprep.subr.bf16.mxu0 %v1300
      %1399 = vmatpush1.bf16.msra.mxu0 %v1299
      %1400 = vmatprep.subr.bf16.mxu0 %v1303
      %1401 = vmatpush1.bf16.msra.mxu0 %v1302
      %1402 = vmatprep.subr.bf16.mxu0 %v1306
      %1403 = vmatpush1.bf16.msra.mxu0 %v1305
      %1404 = vmatprep.subr.bf16.mxu0 %v1309
      %1405 = vmatpush1.bf16.msra.mxu0 %v1308
      %1406 = vmatprep.subr.bf16.mxu0 %v1312
      %1407 = vmatpush1.bf16.msra.mxu0 %v1311
      %1408 = vmatprep.subr.bf16.mxu0 %v1315
      %1409 = vmatpush1.bf16.msra.mxu0 %v1314
      %1410 = vmatprep.subr.bf16.mxu0 %v1318
      %1411 = vmatpush1.bf16.msra.mxu0 %v1317
      %1412 = vmatprep.subr.bf16.mxu0 %v1321
      %1413 = vmatpush1.bf16.msra.mxu0 %v1320
      %1414 = vmatprep.subr.bf16.mxu0 %v1324
      %1415 = vmatpush1.bf16.msra.mxu0 %v1323
      %1416 = vmatprep.subr.bf16.mxu0 %v1327
      %1417 = vmatpush1.bf16.msra.mxu0 %v1326
      %1418 = vmatprep.subr.bf16.mxu0 %v1330
      %1419 = vmatpush1.bf16.msra.mxu0 %v1329
      %1420 = vmatprep.mubr.bf16.mxu0 %v1372
      %1421 = vmatmul.mubr.bf16.gmra.mrb[0].mxu0 %v1371
      %v1422 = vpop.f32.mrb[0].mxu0
      %v1423 = vadd.f32 %v1344, %v1422
      %v1424 = vpop.f32.mrb[0].mxu0
      %v1425 = vadd.f32 %v1344, %v1424
      %v1426 = vpop.f32.mrb[0].mxu0
      %v1427 = vadd.f32 %v1349, %v1426
      %v1428 = vpop.f32.mrb[0].mxu0
      %v1429 = vadd.f32 %v1349, %v1428
      %1430 = vmatprep.mubr.bf16.mxu0 %v1375
      %1431 = vmatmul.mubr.bf16.gmra.mrb[0].mxu0 %v1374
      %v1432 = vpop.f32.mrb[0].mxu0
      %v1433 = vadd.f32 %v1354, %v1432
      %v1434 = vpop.f32.mrb[0].mxu0
      %v1435 = vadd.f32 %v1354, %v1434
      %v1436 = vpop.f32.mrb[0].mxu0
      %v1437 = vpop.f32.mrb[0].mxu0
      %1438 = vdwg.mxu0
      %1439 = vmatprep.subr.bf16.mxu0 %v1333
      %1440 = vmatpush1.bf16.msra.mxu0 %v1332
      %1441 = vmatprep.subr.bf16.mxu0 %v1336
      %1442 = vmatpush1.bf16.msra.mxu0 %v1335
      %1443 = vmatprep.subr.bf16.mxu0 0
      %1444 = vmatpush1.bf16.msra.mxu0 0
      %1445 = vmatprep.subr.bf16.mxu0 0
      %1446 = vmatpush1.bf16.msra.mxu0 0
      %1447 = vmatprep.subr.bf16.mxu0 0
      %1448 = vmatpush1.bf16.msra.mxu0 0
      %1449 = vmatprep.subr.bf16.mxu0 0
      %1450 = vmatpush1.bf16.msra.mxu0 0
      %1451 = vmatprep.subr.bf16.mxu0 0
      %1452 = vmatpush1.bf16.msra.mxu0 0
      %1453 = vmatprep.subr.bf16.mxu0 0
      %1454 = vmatpush1.bf16.msra.mxu0 0
      %1455 = vmatprep.subr.bf16.mxu0 0
      %1456 = vmatpush1.bf16.msra.mxu0 0
      %1457 = vmatprep.subr.bf16.mxu0 0
      %1458 = vmatpush1.bf16.msra.mxu0 0
      %1459 = vmatprep.subr.bf16.mxu0 0
      %1460 = vmatpush1.bf16.msra.mxu0 0
      %1461 = vmatprep.subr.bf16.mxu0 0
      %1462 = vmatpush1.bf16.msra.mxu0 0
      %1463 = vmatprep.subr.bf16.mxu0 0
      %1464 = vmatpush1.bf16.msra.mxu0 0
      %1465 = vmatprep.subr.bf16.mxu0 0
      %1466 = vmatpush1.bf16.msra.mxu0 0
      %1467 = vmatprep.subr.bf16.mxu0 0
      %1468 = vmatpush1.bf16.msra.mxu0 0
      %1469 = vmatprep.subr.bf16.mxu0 0
      %1470 = vmatpush1.bf16.msra.mxu0 0
      %1471 = vmatprep.mubr.bf16.mxu0 0
      %1472 = vmatmul.mubr.bf16.gmra.mrb[0].mxu0 %v1383
      %v1473 = vpop.f32.mrb[0].mxu0
      %v1474 = vadd.f32 %v1423, %v1473
      %v1475 = vpop.f32.mrb[0].mxu0
      %v1476 = vadd.f32 %v1425, %v1475
      %v1477 = vpop.f32.mrb[0].mxu0
      %v1478 = vadd.f32 %v1427, %v1477
      %v1479 = vpop.f32.mrb[0].mxu0
      %v1480 = vadd.f32 %v1429, %v1479
      %1481 = vmatprep.mubr.bf16.mxu0 0
      %1482 = vmatmul.mubr.bf16.gmra.mrb[0].mxu0 %v1386
      %v1483 = vpop.f32.mrb[0].mxu0
      %v1484 = vadd.f32 %v1433, %v1483
      %v1485 = vpop.f32.mrb[0].mxu0
      %v1486 = vadd.f32 %v1435, %v1485
      %v1487 = vpop.f32.mrb[0].mxu0
      %v1488 = vpop.f32.mrb[0].mxu0
      %1489 = vdwg.mxu0
      %1490 = vmatprep.subr.bf16.mxu0 0
      %1491 = vmatpush1.bf16.msra.mxu0 %v1286
      %1492 = vmatprep.subr.bf16.mxu0 0
      %1493 = vmatpush1.bf16.msra.mxu0 %v1289
      %1494 = vmatprep.subr.bf16.mxu0 0
      %1495 = vmatpush1.bf16.msra.mxu0 %v1292
      %1496 = vmatprep.subr.bf16.mxu0 0
      %1497 = vmatpush1.bf16.msra.mxu0 %v1295
      %1498 = vmatprep.subr.bf16.mxu0 0
      %1499 = vmatpush1.bf16.msra.mxu0 %v1298
      %1500 = vmatprep.subr.bf16.mxu0 0
      %1501 = vmatpush1.bf16.msra.mxu0 %v1301
      %1502 = vmatprep.subr.bf16.mxu0 0
      %1503 = vmatpush1.bf16.msra.mxu0 %v1304
      %1504 = vmatprep.subr.bf16.mxu0 0
      %1505 = vmatpush1.bf16.msra.mxu0 %v1307
      %1506 = vmatprep.subr.bf16.mxu0 0
      %1507 = vmatpush1.bf16.msra.mxu0 %v1310
      %1508 = vmatprep.subr.bf16.mxu0 0
      %1509 = vmatpush1.bf16.msra.mxu0 %v1313
      %1510 = vmatprep.subr.bf16.mxu0 0
      %1511 = vmatpush1.bf16.msra.mxu0 %v1316
      %1512 = vmatprep.subr.bf16.mxu0 0
      %1513 = vmatpush1.bf16.msra.mxu0 %v1319
      %1514 = vmatprep.subr.bf16.mxu0 0
      %1515 = vmatpush1.bf16.msra.mxu0 %v1322
      %1516 = vmatprep.subr.bf16.mxu0 0
      %1517 = vmatpush1.bf16.msra.mxu0 %v1325
      %1518 = vmatprep.subr.bf16.mxu0 0
      %1519 = vmatpush1.bf16.msra.mxu0 %v1328
      %1520 = vmatprep.subr.bf16.mxu0 0
      %1521 = vmatpush1.bf16.msra.mxu0 %v1331
      %1522 = vmatprep.mubr.bf16.mxu0 %v1372
      %1523 = vmatmul.mubr.bf16.gmra.mrb[0].mxu0 %v1371
      %v1524 = vpop.f32.mrb[0].mxu0
      %v1525 = vadd.f32 %v1344, %v1524
      %v1526 = vpop.f32.mrb[0].mxu0
      %v1527 = vpop.f32.mrb[0].mxu0
      %v1528 = vadd.f32 %v1349, %v1527
      %v1529 = vpop.f32.mrb[0].mxu0
      %1530 = vmatprep.mubr.bf16.mxu0 %v1375
      %1531 = vmatmul.mubr.bf16.gmra.mrb[0].mxu0 %v1374
      %v1532 = vpop.f32.mrb[0].mxu0
      %v1533 = vadd.f32 %v1354, %v1532
      %v1534 = vpop.f32.mrb[0].mxu0
      %v1535 = vpop.f32.mrb[0].mxu0
      %v1536 = vpop.f32.mrb[0].mxu0
      %1537 = vdwg.mxu0
      %1538 = vmatprep.subr.bf16.mxu0 0
      %1539 = vmatpush1.bf16.msra.mxu0 %v1334
      %1540 = vmatprep.subr.bf16.mxu0 0
      %1541 = vmatpush1.bf16.msra.mxu0 %v1337
      %1542 = vmatprep.subr.bf16.mxu0 0
      %1543 = vmatpush1.bf16.msra.mxu0 0
      %1544 = vmatprep.subr.bf16.mxu0 0
      %1545 = vmatpush1.bf16.msra.mxu0 0
      %1546 = vmatprep.subr.bf16.mxu0 0
      %1547 = vmatpush1.bf16.msra.mxu0 0
      %1548 = vmatprep.subr.bf16.mxu0 0
      %1549 = vmatpush1.bf16.msra.mxu0 0
      %1550 = vmatprep.subr.bf16.mxu0 0
      %1551 = vmatpush1.bf16.msra.mxu0 0
      %1552 = vmatprep.subr.bf16.mxu0 0
      %1553 = vmatpush1.bf16.msra.mxu0 0
      %1554 = vmatprep.subr.bf16.mxu0 0
      %1555 = vmatpush1.bf16.msra.mxu0 0
      %1556 = vmatprep.subr.bf16.mxu0 0
      %1557 = vmatpush1.bf16.msra.mxu0 0
      %1558 = vmatprep.subr.bf16.mxu0 0
      %1559 = vmatpush1.bf16.msra.mxu0 0
      %1560 = vmatprep.subr.bf16.mxu0 0
      %1561 = vmatpush1.bf16.msra.mxu0 0
      %1562 = vmatprep.subr.bf16.mxu0 0
      %1563 = vmatpush1.bf16.msra.mxu0 0
      %1564 = vmatprep.subr.bf16.mxu0 0
      %1565 = vmatpush1.bf16.msra.mxu0 0
      %1566 = vmatprep.subr.bf16.mxu0 0
      %1567 = vmatpush1.bf16.msra.mxu0 0
      %1568 = vmatprep.subr.bf16.mxu0 0
      %1569 = vmatpush1.bf16.msra.mxu0 0
      %1570 = vmatprep.mubr.bf16.mxu0 0
      %1571 = vmatmul.mubr.bf16.gmra.mrb[0].mxu0 %v1383
      %v1572 = vpop.f32.mrb[0].mxu0
      %v1573 = vadd.f32 %v1525, %v1572
      %v1574 = vpop.f32.mrb[0].mxu0
      %v1575 = vpop.f32.mrb[0].mxu0
      %v1576 = vadd.f32 %v1528, %v1575
      %v1577 = vpop.f32.mrb[0].mxu0
      %1578 = vmatprep.mubr.bf16.mxu0 0
      %1579 = vmatmul.mubr.bf16.gmra.mrb[0].mxu0 %v1386
      %v1580 = vpop.f32.mrb[0].mxu0
      %v1581 = vadd.f32 %v1533, %v1580
      %v1582 = vpop.f32.mrb[0].mxu0
      %v1583 = vpop.f32.mrb[0].mxu0
      %v1584 = vpop.f32.mrb[0].mxu0
      %1585 = vdwg.mxu0
      %v1586 = vmax.f32 %v1474, 0.0
      %v1587 = vmax.f32 %v1476, 0.0
      %v1588 = vmax.f32 %v1573, 0.0
      %v1589 = vmax.f32 %v1478, 0.0
      %v1590 = vmax.f32 %v1480, 0.0
      %v1591 = vmax.f32 %v1576, 0.0
      %v1592 = vmax.f32 %v1484, 0.0
      %v1593 = vmax.f32 %v1486, 0.0
      %v1594 = vmax.f32 %v1581, 0.0
      %v1595 = vld [vmem:[%s6] sm:$0xf]
      %v1596 = vld [vmem:[%s6 + $0x4] sm:$0xf]
      %v1597 = vld [vmem:[%s6 + $0x8] sm:$0x3]
      %v1598 = vpack.c.bf16 %v1589, %v1586
      %v1599 = vpack.c.bf16 %v1590, %v1587
      %v1600 = vpack.c.bf16 %v1591, %v1588
      %v1601 = vpack.c.bf16 %v1592, %v1592
      %v1602 = vpack.c.bf16 %v1593, %v1593
      %v1603 = vpack.c.bf16 %v1594, %v1594
      %v1604 = vld [vmem:[%s7] sm:$0xff]
      %v1605 = vld [vmem:[%s7 + $0x8] sm:$0xff]
      %v1606 = vld [vmem:[%s7 + $0x10] sm:$0xf]
      %1608 = vset.pattern.permute.xlu0 0
      %1609 = vperm.xlu0 %1608, %v1604
      %v1610 = vpop.permute.xlu0 %1609
      %1613 = vset.pattern.permute.xlu0 0
      %1614 = vperm.xlu0 %1613, %v1605
      %v1615 = vpop.permute.xlu0 %1614
      %1618 = vset.pattern.permute.xlu0 0
      %1619 = vperm.xlu0 %1618, %v1606
      %v1620 = vpop.permute.xlu0 %1619
      %v1625 = vunpack.c.l.b16 %v1595
      %v1626 = vunpack.c.l.b16 %v1596
      %v1627 = vunpack.c.l.b16 %v1597
      %v1628 = vpack.c.b16 %v1626, %v1625
      %v1629 = vpack.c.b16 %v1627, %v1627
      %vm1630 = vcmask 162816
      %v1632 = vsel %vm1630, %v1628, 0
      %v1635 = vsel %vm1630, %v1629, 0
      %v1638 = vsel %vm402, %v1601, 0
      %v1641 = vsel %vm402, %v1602, 0
      %v1644 = vsel %vm402, %v1603, 0
      %1646 = vmatprep.subr.bf16.mxu0 %v1599
      %1647 = vmatpush1.bf16.msra.mxu0 %v1598
      %1648 = vmatprep.subr.bf16.mxu0 %v1641
      %1649 = vmatpush1.bf16.msra.mxu0 %v1638
      %1650 = vmatprep.subr.bf16.mxu0 0
      %1651 = vmatpush1.bf16.msra.mxu0 0
      %1652 = vmatprep.subr.bf16.mxu0 0
      %1653 = vmatpush1.bf16.msra.mxu0 0
      %1654 = vmatprep.subr.bf16.mxu0 0
      %1655 = vmatpush1.bf16.msra.mxu0 0
      %1656 = vmatprep.subr.bf16.mxu0 0
      %1657 = vmatpush1.bf16.msra.mxu0 0
      %1658 = vmatprep.subr.bf16.mxu0 0
      %1659 = vmatpush1.bf16.msra.mxu0 0
      %1660 = vmatprep.subr.bf16.mxu0 0
      %1661 = vmatpush1.bf16.msra.mxu0 0
      %1662 = vmatprep.subr.bf16.mxu0 0
      %1663 = vmatpush1.bf16.msra.mxu0 0
      %1664 = vmatprep.subr.bf16.mxu0 0
      %1665 = vmatpush1.bf16.msra.mxu0 0
      %1666 = vmatprep.subr.bf16.mxu0 0
      %1667 = vmatpush1.bf16.msra.mxu0 0
      %1668 = vmatprep.subr.bf16.mxu0 0
      %1669 = vmatpush1.bf16.msra.mxu0 0
      %1670 = vmatprep.subr.bf16.mxu0 0
      %1671 = vmatpush1.bf16.msra.mxu0 0
      %1672 = vmatprep.subr.bf16.mxu0 0
      %1673 = vmatpush1.bf16.msra.mxu0 0
      %1674 = vmatprep.subr.bf16.mxu0 0
      %1675 = vmatpush1.bf16.msra.mxu0 0
      %1676 = vmatprep.subr.bf16.mxu0 0
      %1677 = vmatpush1.bf16.msra.mxu0 0
      %1678 = vmatprep.mubr.bf16.mxu0 0
      %1679 = vmatmul.mubr.bf16.gmra.mrb[0].mxu0 %v1632
      %v1680 = vpop.f32.mrb[0].mxu0
      %v1681 = vadd.f32 %v1610, %v1680
      %v1682 = vpop.f32.mrb[0].mxu0
      %v1683 = vadd.f32 %v1610, %v1682
      %v1684 = vpop.f32.mrb[0].mxu0
      %v1685 = vadd.f32 %v1615, %v1684
      %v1686 = vpop.f32.mrb[0].mxu0
      %v1687 = vadd.f32 %v1615, %v1686
      %1688 = vmatprep.mubr.bf16.mxu0 0
      %1689 = vmatmul.mubr.bf16.gmra.mrb[0].mxu0 %v1635
      %v1690 = vpop.f32.mrb[0].mxu0
      %v1691 = vadd.f32 %v1620, %v1690
      %v1692 = vpop.f32.mrb[0].mxu0
      %v1693 = vadd.f32 %v1620, %v1692
      %v1694 = vpop.f32.mrb[0].mxu0
      %v1695 = vpop.f32.mrb[0].mxu0
      %1696 = vdwg.mxu0
      %1697 = vmatprep.subr.bf16.mxu0 0
      %1698 = vmatpush1.bf16.msra.mxu0 %v1600
      %1699 = vmatprep.subr.bf16.mxu0 0
      %1700 = vmatpush1.bf16.msra.mxu0 %v1644
      %1701 = vmatprep.subr.bf16.mxu0 0
      %1702 = vmatpush1.bf16.msra.mxu0 0
      %1703 = vmatprep.subr.bf16.mxu0 0
      %1704 = vmatpush1.bf16.msra.mxu0 0
      %1705 = vmatprep.subr.bf16.mxu0 0
      %1706 = vmatpush1.bf16.msra.mxu0 0
      %1707 = vmatprep.subr.bf16.mxu0 0
      %1708 = vmatpush1.bf16.msra.mxu0 0
      %1709 = vmatprep.subr.bf16.mxu0 0
      %1710 = vmatpush1.bf16.msra.mxu0 0
      %1711 = vmatprep.subr.bf16.mxu0 0
      %1712 = vmatpush1.bf16.msra.mxu0 0
      %1713 = vmatprep.subr.bf16.mxu0 0
      %1714 = vmatpush1.bf16.msra.mxu0 0
      %1715 = vmatprep.subr.bf16.mxu0 0
      %1716 = vmatpush1.bf16.msra.mxu0 0
      %1717 = vmatprep.subr.bf16.mxu0 0
      %1718 = vmatpush1.bf16.msra.mxu0 0
      %1719 = vmatprep.subr.bf16.mxu0 0
      %1720 = vmatpush1.bf16.msra.mxu0 0
      %1721 = vmatprep.subr.bf16.mxu0 0
      %1722 = vmatpush1.bf16.msra.mxu0 0
      %1723 = vmatprep.subr.bf16.mxu0 0
      %1724 = vmatpush1.bf16.msra.mxu0 0
      %1725 = vmatprep.subr.bf16.mxu0 0
      %1726 = vmatpush1.bf16.msra.mxu0 0
      %1727 = vmatprep.subr.bf16.mxu0 0
      %1728 = vmatpush1.bf16.msra.mxu0 0
      %1729 = vmatprep.mubr.bf16.mxu0 0
      %1730 = vmatmul.mubr.bf16.gmra.mrb[0].mxu0 %v1632
      %v1731 = vpop.f32.mrb[0].mxu0
      %v1732 = vadd.f32 %v1610, %v1731
      %v1733 = vpop.f32.mrb[0].mxu0
      %v1734 = vpop.f32.mrb[0].mxu0
      %v1735 = vadd.f32 %v1615, %v1734
      %v1736 = vpop.f32.mrb[0].mxu0
      %1737 = vmatprep.mubr.bf16.mxu0 0
      %1738 = vmatmul.mubr.bf16.gmra.mrb[0].mxu0 %v1635
      %v1739 = vpop.f32.mrb[0].mxu0
      %v1740 = vadd.f32 %v1620, %v1739
      %v1741 = vpop.f32.mrb[0].mxu0
      %v1742 = vpop.f32.mrb[0].mxu0
      %v1743 = vpop.f32.mrb[0].mxu0
      %1744 = vdwg.mxu0
      %1745 = vst [vmem:[%s305] sm:$0xff] %v1681
      %1746 = vst [vmem:[%s305 + $0x8] sm:$0xff] %v1683
      %1747 = vst.msk [vmem:[%s305 + $0x10] sm:$0xff] %vm991, %v1732
      %1748 = vst [vmem:[%s305 + $0x18] sm:$0xff] %v1685
      %1749 = vst [vmem:[%s305 + $0x20] sm:$0xff] %v1687
      %1750 = vst.msk [vmem:[%s305 + $0x28] sm:$0xff] %vm991, %v1735
      %1751 = vst [vmem:[%s305 + $0x30] sm:$0xf] %v1691
      %1752 = vst [vmem:[%s305 + $0x38] sm:$0xf] %v1693
      %vm1753 = vcmask 551936
      %1754 = vst.msk [vmem:[%s305 + $0x40] sm:$0xf] %vm1753, %v1740
      %p1755 = scmp.lt.s32.totalorder %s19, 1
      %s1756 = scalar_select %p1755, %s19, 1
      %s1757 = smul.addr %s1756, 9
      %s1758 = smul.addr %s1757, 8
      %s1759 = scalar_lea.vmem %s8, %s1758
      // Predicated region
      $region53: #{submodel_forward.1} parent=51 // pred_check
        %p1760 = pneg %p210
      $region54: #{submodel_forward.1} parent=51 // pred_check_branch
        %1762 = sbr.rel (%p1760) target = $region56
      $region55: #{submodel_forward.1} parent=51 // pred_region
        _
      $region56: #{submodel_forward.1} parent=51 // pred_fallthru
        _
    $region52: #{submodel_forward.1} parent=5 // pred_fallthru
      _
    %p1763 = scmp.le.s32.totalorder 2, %s14
    // Predicated region
    $region57: #{submodel_forward.1} parent=5 // pred_check
      %p1764 = pneg %p1763
    $region58: #{submodel_forward.1} parent=5 // pred_check_branch
      %1766 = sbr.rel (%p1764) target = $region60
    $region59: #{submodel_forward.1} parent=5 // pred_region
      %s1767 = ssub.s32 %s14, 2
      // Predicated region
      $region61: #{submodel_forward.1} parent=59 // pred_check
        %p1768 = pneg %p216
      $region62: #{submodel_forward.1} parent=59 // pred_check_branch
        %1770 = sbr.rel (%p1768) target = $region64
      $region63: #{submodel_forward.1} parent=59 // pred_region
        %p1771 = scmp.lt.s32.totalorder %s20, 1
        %s1772 = scalar_select %p1771, %s20, 1
        %s1773 = smul.addr %s1772, 9
        %s1774 = smul.addr %s1773, 8
        %s1775 = scalar_lea.vmem %s8, %s1774
      $region64: #{submodel_forward.1} parent=59 // pred_fallthru
        _
    $region60: #{submodel_forward.1} parent=5 // pred_fallthru
      _
  $region6: #{submodel_forward.1} parent=0 // loop_footer
    %s18 = sadd.s32 1, %s14
  $region7: #{submodel_forward.1} parent=0 // loop_footer_branch
    %13 = sbr.rel target = $region3
  $region8: #{submodel_forward.1} parent=0 // loop_exit
    _

</llo_original>
